<compile_context>
chip_gen: v6e
topology: v6e:2x2x1
jax: 0.10.0
libtpu: 0.0.40
codegen_flags: <defaults>
</compile_context>

<pallas_src>
from functools import partial

import jax
import jax.numpy as jnp
from jax import lax
from jax.experimental import pallas as pl
from jax.experimental.pallas import tpu as pltpu

VOCAB = 100     # input_size
EMB = 20        # emb_size
HID = 10        # hidden_size
N_BATCH = 2
T_SEQ = 8

LANE = 128      # one gate per 128-lane block


def lstm_pair_kernel(gx_ref, whh_ref, wfc_ref, bfc_ref, out_ref,
                     *, seq_len, batch_rows):
    """Fused siamese LSTM recurrence, entirely in VMEM.

    gx_ref  : [T*B, 4*128]  precomputed input-gate activations
                            (embedding @ W_ih^T + b_ih + b_hh), time-major,
                            both sequences stacked on the batch axis, padded
                            to B = batch_rows (multiple of 8).  Gate order
                            (i, f, o, g), each gate in its own 128-lane block,
                            padded lanes are exactly zero.
    whh_ref : [128, 4*128]  hidden->gate weights, same padded layout
    wfc_ref : [128, 2]      fc_final weights (rows >= H are zero)
    bfc_ref : [1, 2]
    out_ref : [N, 2]
    """
    n_out = out_ref.shape[0]
    whh = whh_ref[...]                                   # hoisted load, [128, 512]

    def step(t, carry):
        h, c = carry                                     # [B, 128] each
        row = pl.multiple_of(t * batch_rows, batch_rows)
        gates = gx_ref[pl.ds(row, batch_rows), :] + jnp.dot(
            h, whh, preferred_element_type=jnp.float32)           # [B, 4*128]
        # Lane-aligned gate blocks: [ i | f | o | g ] x 128 lanes each.
        sig = jax.nn.sigmoid(gates[:, :3 * LANE])                 # one EUP region
        g_g = jnp.tanh(gates[:, 3 * LANE:])
        i_g = sig[:, 0:LANE]
        f_g = sig[:, LANE:2 * LANE]
        o_g = sig[:, 2 * LANE:3 * LANE]
        c_new = f_g * c + i_g * g_g
        h_new = o_g * jnp.tanh(c_new)
        return h_new, c_new

    h0 = jnp.zeros((batch_rows, LANE), jnp.float32)
    c0 = jnp.zeros((batch_rows, LANE), jnp.float32)
    h_fin, _ = lax.fori_loop(0, seq_len, step, (h0, c0), unroll=True)

    # Siamese MULT combine (rows 0:N are seq1, rows N:2N are seq2; FC rows past
    # HID are zero so padded lanes contribute nothing), then fc_final.
    combo = h_fin[:n_out, :] * h_fin[n_out:2 * n_out, :]          # [N, 128]
    out_ref[...] = (jnp.dot(combo, wfc_ref[...],
                            preferred_element_type=jnp.float32)
                    + bfc_ref[...])


def pack_kernel_params(embedding, w_ih, w_hh, b_ih, b_hh, w_fc, b_fc):
    """Repack torch-layout weights into the lane-aligned kernel layout and fold
    the embedding + input projection + bias into one per-vocab gate table.

    Torch LSTM gate row order is (i, f, g, o); the kernel uses (i, f, o, g) so
    the three sigmoid gates are lane-contiguous. Each gate is zero-padded to a
    128-lane block; hidden rows are zero-padded to 128.
    """
    torch_idx = {"i": 0, "f": 1, "g": 2, "o": 3}
    order = ("i", "f", "o", "g")
    b_sum = b_ih + b_hh

    wih_pad = jnp.zeros((EMB, 4 * LANE), jnp.float32)
    whh_pad = jnp.zeros((LANE, 4 * LANE), jnp.float32)
    b_pad = jnp.zeros((1, 4 * LANE), jnp.float32)
    for k, g in enumerate(order):
        r0 = torch_idx[g] * HID
        wih_pad = wih_pad.at[:, k * LANE:k * LANE + HID].set(w_ih[r0:r0 + HID, :].T)
        whh_pad = whh_pad.at[:HID, k * LANE:k * LANE + HID].set(w_hh[r0:r0 + HID, :].T)
        b_pad = b_pad.at[0, k * LANE:k * LANE + HID].set(b_sum[r0:r0 + HID])

    # Fold: emb_gates[v] = embedding[v] @ W_ih^T + (b_ih + b_hh), padded layout.
    # Padded lanes are zero (zero columns in wih_pad / b_pad).
    emb_gates = embedding.astype(jnp.float32) @ wih_pad + b_pad   # [VOCAB, 4*128]

    wfc_pad = jnp.zeros((LANE, 2), jnp.float32).at[:HID, :].set(w_fc.T)
    return {
        "emb_gates": emb_gates,  # [VOCAB, 4*128]
        "whh_pad": whh_pad,      # [128, 4*128]
        "wfc_pad": wfc_pad,      # [128, 2]
        "bfc": b_fc[None, :],    # [1, 2]
    }


def make_params(key):
    ks = jax.random.split(key, 7)
    k_lstm = 1.0 / jnp.sqrt(jnp.float32(HID))
    embedding = jax.random.normal(ks[0], (VOCAB, EMB), jnp.float32)
    # Raw torch-layout parameters (gate row order i, f, g, o).
    w_ih = jax.random.uniform(ks[1], (4 * HID, EMB), jnp.float32, -k_lstm, k_lstm)
    w_hh = jax.random.uniform(ks[2], (4 * HID, HID), jnp.float32, -k_lstm, k_lstm)
    b_ih = jax.random.uniform(ks[3], (4 * HID,), jnp.float32, -k_lstm, k_lstm)
    b_hh = jax.random.uniform(ks[4], (4 * HID,), jnp.float32, -k_lstm, k_lstm)
    k_fc = 1.0 / jnp.sqrt(jnp.float32(HID))   # fc_final fan_in = hidden_mult = H
    w_fc = jax.random.uniform(ks[5], (2, HID), jnp.float32, -k_fc, k_fc)
    b_fc = jax.random.uniform(ks[6], (2,), jnp.float32, -k_fc, k_fc)

    params = {
        "embedding": embedding,
        "w_ih": w_ih, "w_hh": w_hh, "b_ih": b_ih, "b_hh": b_hh,
        "w_fc": w_fc, "b_fc": b_fc,
    }
    params.update(pack_kernel_params(embedding, w_ih, w_hh, b_ih, b_hh, w_fc, b_fc))
    return params


@jax.jit
def lstm_forward(tokens1, tokens2, params):
    n, t = tokens1.shape
    # Per-call input work is a single gather from the folded per-vocab gate
    # table (embedding + input projection + bias already applied at pack time).
    tok = jnp.concatenate([tokens1, tokens2], axis=0)                 # [2N, T]
    gx = jnp.take(params["emb_gates"], tok, axis=0)                   # [2N, T, 4*128]
    # Pad the stacked siamese batch up to a full sublane tile so the per-step
    # slices inside the kernel are 8-row aligned, then flatten to time-major
    # [T*B, 4*128] (free reshapes in XLA).
    b_rows = -(-2 * n // 8) * 8
    gx = jnp.pad(gx, ((0, b_rows - 2 * n), (0, 0), (0, 0)))
    gx = jnp.transpose(gx, (1, 0, 2)).reshape(t * b_rows, 4 * LANE)

    vmem = pl.BlockSpec(memory_space=pltpu.MemorySpace.VMEM)
    out = pl.pallas_call(
        partial(lstm_pair_kernel, seq_len=t, batch_rows=b_rows),
        out_shape=jax.ShapeDtypeStruct((n, 2), jnp.float32),
        in_specs=[vmem] * 4,
        out_specs=vmem,
    )(gx, params["whh_pad"], params["wfc_pad"], params["bfc"])
    return out[None]                                     # [1, N, 2] (torch unsqueeze)


def lstm_forward_ref(tokens1, tokens2, params):
    """Pure-JAX reference using the RAW torch-layout weights (gate order i,f,g,o),
    so it independently validates the kernel's folded/reordered weight transform."""
    w_ih, w_hh = params["w_ih"], params["w_hh"]
    b = params["b_ih"] + params["b_hh"]

    def run(tokens):
        x = jnp.take(params["embedding"], tokens, axis=0)             # [N, T, E]
        h = jnp.zeros((tokens.shape[0], HID), jnp.float32)
        c = jnp.zeros((tokens.shape[0], HID), jnp.float32)
        for t in range(tokens.shape[1]):
            gates = x[:, t, :] @ w_ih.T + h @ w_hh.T + b
            i_g = jax.nn.sigmoid(gates[:, 0:HID])
            f_g = jax.nn.sigmoid(gates[:, HID:2 * HID])
            g_g = jnp.tanh(gates[:, 2 * HID:3 * HID])
            o_g = jax.nn.sigmoid(gates[:, 3 * HID:4 * HID])
            c = f_g * c + i_g * g_g
            h = o_g * jnp.tanh(c)
        return h

    combo = run(tokens1) * run(tokens2)                               # MULT
    return (combo @ params["w_fc"].T + params["b_fc"])[None]


if __name__ == "__main__":
    key = jax.random.PRNGKey(0)
    k_p, k_t1, k_t2 = jax.random.split(key, 3)
    params = make_params(k_p)
    tokens1 = jax.random.randint(k_t1, (N_BATCH, T_SEQ), 0, VOCAB, dtype=jnp.int32)
    tokens2 = jax.random.randint(k_t2, (N_BATCH, T_SEQ), 0, VOCAB, dtype=jnp.int32)

    out = jax.block_until_ready(lstm_forward(tokens1, tokens2, params))
    ref = jax.block_until_ready(lstm_forward_ref(tokens1, tokens2, params))

    assert out.shape == (1, N_BATCH, 2), out.shape
    assert jnp.allclose(out, ref, atol=1e-4, rtol=1e-4), (out, ref)
    print("KERNEL_OK")
</pallas_src>

<mosaic_0001>
module attributes {stable_mosaic.version = 11 : i64} {
  func.func @lstm_pair_kernel(%arg0: memref<64x512xf32, #tpu.memory_space<vmem>>, %arg1: memref<128x512xf32, #tpu.memory_space<vmem>>, %arg2: memref<128x2xf32, #tpu.memory_space<vmem>>, %arg3: memref<1x2xf32, #tpu.memory_space<vmem>>, %arg4: memref<2x2xf32, #tpu.memory_space<vmem>>) attributes {dimension_semantics = [], scalar_prefetch = 0 : i64, scratch_operands = 0 : i64, tpu.core_type = #tpu.core_type<tc>} {
    %c0 = arith.constant 0 : index
    %c0_0 = arith.constant 0 : index
    %0 = vector.load %arg1[%c0, %c0_0] : memref<128x512xf32, #tpu.memory_space<vmem>>, vector<128x512xf32>
    %cst = arith.constant 0.000000e+00 : f32
    %1 = vector.broadcast %cst : f32 to vector<8x128xf32>
    %cst_1 = arith.constant 0.000000e+00 : f32
    %2 = vector.broadcast %cst_1 : f32 to vector<8x128xf32>
    %c0_i32 = arith.constant 0 : i32
    %c8_i32 = arith.constant 8 : i32
    %3 = arith.muli %c0_i32, %c8_i32 : i32
    %4 = tpu.assume_multiple %3, 8 : i32
    %5 = arith.index_cast %4 : i32 to index
    %c0_2 = arith.constant 0 : index
    %6 = vector.load %arg0[%5, %c0_2] : memref<64x512xf32, #tpu.memory_space<vmem>>, vector<8x512xf32>
    %cst_3 = arith.constant dense<0.000000e+00> : vector<8x512xf32>
    %7 = tpu.matmul %1, %0, %cst_3 {dimension_numbers = #tpu.dot_dimension_numbers<[1], [0], [0], [1], [0, 0, 1, 1], [], []>} : vector<8x128xf32>, vector<128x512xf32>, vector<8x512xf32> -> vector<8x512xf32>
    %8 = arith.addf %6, %7 : vector<8x512xf32>
    %9 = vector.extract_strided_slice %8 {offsets = [0, 0], sizes = [8, 384], strides = [1, 1]} : vector<8x512xf32> to vector<8x384xf32>
    %10 = arith.negf %9 : vector<8x384xf32>
    %11 = math.exp %10 : vector<8x384xf32>
    %cst_4 = arith.constant 1.000000e+00 : f32
    %12 = vector.broadcast %cst_4 : f32 to vector<8x384xf32>
    %13 = arith.addf %12, %11 : vector<8x384xf32>
    %14 = arith.divf %12, %13 : vector<8x384xf32>
    %15 = vector.extract_strided_slice %8 {offsets = [0, 384], sizes = [8, 128], strides = [1, 1]} : vector<8x512xf32> to vector<8x128xf32>
    %16 = math.tanh %15 : vector<8x128xf32>
    %17 = vector.extract_strided_slice %14 {offsets = [0, 0], sizes = [8, 128], strides = [1, 1]} : vector<8x384xf32> to vector<8x128xf32>
    %18 = vector.extract_strided_slice %14 {offsets = [0, 128], sizes = [8, 128], strides = [1, 1]} : vector<8x384xf32> to vector<8x128xf32>
    %19 = vector.extract_strided_slice %14 {offsets = [0, 256], sizes = [8, 128], strides = [1, 1]} : vector<8x384xf32> to vector<8x128xf32>
    %20 = arith.mulf %18, %2 : vector<8x128xf32>
    %21 = arith.mulf %17, %16 : vector<8x128xf32>
    %22 = arith.addf %20, %21 : vector<8x128xf32>
    %23 = math.tanh %22 : vector<8x128xf32>
    %24 = arith.mulf %19, %23 : vector<8x128xf32>
    %c1_i32 = arith.constant 1 : i32
    %c8_i32_5 = arith.constant 8 : i32
    %25 = arith.muli %c1_i32, %c8_i32_5 : i32
    %26 = tpu.assume_multiple %25, 8 : i32
    %27 = arith.index_cast %26 : i32 to index
    %c0_6 = arith.constant 0 : index
    %28 = vector.load %arg0[%27, %c0_6] : memref<64x512xf32, #tpu.memory_space<vmem>>, vector<8x512xf32>
    %cst_7 = arith.constant dense<0.000000e+00> : vector<8x512xf32>
    %29 = tpu.matmul %24, %0, %cst_7 {dimension_numbers = #tpu.dot_dimension_numbers<[1], [0], [0], [1], [0, 0, 1, 1], [], []>} : vector<8x128xf32>, vector<128x512xf32>, vector<8x512xf32> -> vector<8x512xf32>
    %30 = arith.addf %28, %29 : vector<8x512xf32>
    %31 = vector.extract_strided_slice %30 {offsets = [0, 0], sizes = [8, 384], strides = [1, 1]} : vector<8x512xf32> to vector<8x384xf32>
    %32 = arith.negf %31 : vector<8x384xf32>
    %33 = math.exp %32 : vector<8x384xf32>
    %cst_8 = arith.constant 1.000000e+00 : f32
    %34 = vector.broadcast %cst_8 : f32 to vector<8x384xf32>
    %35 = arith.addf %34, %33 : vector<8x384xf32>
    %36 = arith.divf %34, %35 : vector<8x384xf32>
    %37 = vector.extract_strided_slice %30 {offsets = [0, 384], sizes = [8, 128], strides = [1, 1]} : vector<8x512xf32> to vector<8x128xf32>
    %38 = math.tanh %37 : vector<8x128xf32>
    %39 = vector.extract_strided_slice %36 {offsets = [0, 0], sizes = [8, 128], strides = [1, 1]} : vector<8x384xf32> to vector<8x128xf32>
    %40 = vector.extract_strided_slice %36 {offsets = [0, 128], sizes = [8, 128], strides = [1, 1]} : vector<8x384xf32> to vector<8x128xf32>
    %41 = vector.extract_strided_slice %36 {offsets = [0, 256], sizes = [8, 128], strides = [1, 1]} : vector<8x384xf32> to vector<8x128xf32>
    %42 = arith.mulf %40, %22 : vector<8x128xf32>
    %43 = arith.mulf %39, %38 : vector<8x128xf32>
    %44 = arith.addf %42, %43 : vector<8x128xf32>
    %45 = math.tanh %44 : vector<8x128xf32>
    %46 = arith.mulf %41, %45 : vector<8x128xf32>
    %c2_i32 = arith.constant 2 : i32
    %c8_i32_9 = arith.constant 8 : i32
    %47 = arith.muli %c2_i32, %c8_i32_9 : i32
    %48 = tpu.assume_multiple %47, 8 : i32
    %49 = arith.index_cast %48 : i32 to index
    %c0_10 = arith.constant 0 : index
    %50 = vector.load %arg0[%49, %c0_10] : memref<64x512xf32, #tpu.memory_space<vmem>>, vector<8x512xf32>
    %cst_11 = arith.constant dense<0.000000e+00> : vector<8x512xf32>
    %51 = tpu.matmul %46, %0, %cst_11 {dimension_numbers = #tpu.dot_dimension_numbers<[1], [0], [0], [1], [0, 0, 1, 1], [], []>} : vector<8x128xf32>, vector<128x512xf32>, vector<8x512xf32> -> vector<8x512xf32>
    %52 = arith.addf %50, %51 : vector<8x512xf32>
    %53 = vector.extract_strided_slice %52 {offsets = [0, 0], sizes = [8, 384], strides = [1, 1]} : vector<8x512xf32> to vector<8x384xf32>
    %54 = arith.negf %53 : vector<8x384xf32>
    %55 = math.exp %54 : vector<8x384xf32>
    %cst_12 = arith.constant 1.000000e+00 : f32
    %56 = vector.broadcast %cst_12 : f32 to vector<8x384xf32>
    %57 = arith.addf %56, %55 : vector<8x384xf32>
    %58 = arith.divf %56, %57 : vector<8x384xf32>
    %59 = vector.extract_strided_slice %52 {offsets = [0, 384], sizes = [8, 128], strides = [1, 1]} : vector<8x512xf32> to vector<8x128xf32>
    %60 = math.tanh %59 : vector<8x128xf32>
    %61 = vector.extract_strided_slice %58 {offsets = [0, 0], sizes = [8, 128], strides = [1, 1]} : vector<8x384xf32> to vector<8x128xf32>
    %62 = vector.extract_strided_slice %58 {offsets = [0, 128], sizes = [8, 128], strides = [1, 1]} : vector<8x384xf32> to vector<8x128xf32>
    %63 = vector.extract_strided_slice %58 {offsets = [0, 256], sizes = [8, 128], strides = [1, 1]} : vector<8x384xf32> to vector<8x128xf32>
    %64 = arith.mulf %62, %44 : vector<8x128xf32>
    %65 = arith.mulf %61, %60 : vector<8x128xf32>
    %66 = arith.addf %64, %65 : vector<8x128xf32>
    %67 = math.tanh %66 : vector<8x128xf32>
    %68 = arith.mulf %63, %67 : vector<8x128xf32>
    %c3_i32 = arith.constant 3 : i32
    %c8_i32_13 = arith.constant 8 : i32
    %69 = arith.muli %c3_i32, %c8_i32_13 : i32
    %70 = tpu.assume_multiple %69, 8 : i32
    %71 = arith.index_cast %70 : i32 to index
    %c0_14 = arith.constant 0 : index
    %72 = vector.load %arg0[%71, %c0_14] : memref<64x512xf32, #tpu.memory_space<vmem>>, vector<8x512xf32>
    %cst_15 = arith.constant dense<0.000000e+00> : vector<8x512xf32>
    %73 = tpu.matmul %68, %0, %cst_15 {dimension_numbers = #tpu.dot_dimension_numbers<[1], [0], [0], [1], [0, 0, 1, 1], [], []>} : vector<8x128xf32>, vector<128x512xf32>, vector<8x512xf32> -> vector<8x512xf32>
    %74 = arith.addf %72, %73 : vector<8x512xf32>
    %75 = vector.extract_strided_slice %74 {offsets = [0, 0], sizes = [8, 384], strides = [1, 1]} : vector<8x512xf32> to vector<8x384xf32>
    %76 = arith.negf %75 : vector<8x384xf32>
    %77 = math.exp %76 : vector<8x384xf32>
    %cst_16 = arith.constant 1.000000e+00 : f32
    %78 = vector.broadcast %cst_16 : f32 to vector<8x384xf32>
    %79 = arith.addf %78, %77 : vector<8x384xf32>
    %80 = arith.divf %78, %79 : vector<8x384xf32>
    %81 = vector.extract_strided_slice %74 {offsets = [0, 384], sizes = [8, 128], strides = [1, 1]} : vector<8x512xf32> to vector<8x128xf32>
    %82 = math.tanh %81 : vector<8x128xf32>
    %83 = vector.extract_strided_slice %80 {offsets = [0, 0], sizes = [8, 128], strides = [1, 1]} : vector<8x384xf32> to vector<8x128xf32>
    %84 = vector.extract_strided_slice %80 {offsets = [0, 128], sizes = [8, 128], strides = [1, 1]} : vector<8x384xf32> to vector<8x128xf32>
    %85 = vector.extract_strided_slice %80 {offsets = [0, 256], sizes = [8, 128], strides = [1, 1]} : vector<8x384xf32> to vector<8x128xf32>
    %86 = arith.mulf %84, %66 : vector<8x128xf32>
    %87 = arith.mulf %83, %82 : vector<8x128xf32>
    %88 = arith.addf %86, %87 : vector<8x128xf32>
    %89 = math.tanh %88 : vector<8x128xf32>
    %90 = arith.mulf %85, %89 : vector<8x128xf32>
    %c4_i32 = arith.constant 4 : i32
    %c8_i32_17 = arith.constant 8 : i32
    %91 = arith.muli %c4_i32, %c8_i32_17 : i32
    %92 = tpu.assume_multiple %91, 8 : i32
    %93 = arith.index_cast %92 : i32 to index
    %c0_18 = arith.constant 0 : index
    %94 = vector.load %arg0[%93, %c0_18] : memref<64x512xf32, #tpu.memory_space<vmem>>, vector<8x512xf32>
    %cst_19 = arith.constant dense<0.000000e+00> : vector<8x512xf32>
    %95 = tpu.matmul %90, %0, %cst_19 {dimension_numbers = #tpu.dot_dimension_numbers<[1], [0], [0], [1], [0, 0, 1, 1], [], []>} : vector<8x128xf32>, vector<128x512xf32>, vector<8x512xf32> -> vector<8x512xf32>
    %96 = arith.addf %94, %95 : vector<8x512xf32>
    %97 = vector.extract_strided_slice %96 {offsets = [0, 0], sizes = [8, 384], strides = [1, 1]} : vector<8x512xf32> to vector<8x384xf32>
    %98 = arith.negf %97 : vector<8x384xf32>
    %99 = math.exp %98 : vector<8x384xf32>
    %cst_20 = arith.constant 1.000000e+00 : f32
    %100 = vector.broadcast %cst_20 : f32 to vector<8x384xf32>
    %101 = arith.addf %100, %99 : vector<8x384xf32>
    %102 = arith.divf %100, %101 : vector<8x384xf32>
    %103 = vector.extract_strided_slice %96 {offsets = [0, 384], sizes = [8, 128], strides = [1, 1]} : vector<8x512xf32> to vector<8x128xf32>
    %104 = math.tanh %103 : vector<8x128xf32>
    %105 = vector.extract_strided_slice %102 {offsets = [0, 0], sizes = [8, 128], strides = [1, 1]} : vector<8x384xf32> to vector<8x128xf32>
    %106 = vector.extract_strided_slice %102 {offsets = [0, 128], sizes = [8, 128], strides = [1, 1]} : vector<8x384xf32> to vector<8x128xf32>
    %107 = vector.extract_strided_slice %102 {offsets = [0, 256], sizes = [8, 128], strides = [1, 1]} : vector<8x384xf32> to vector<8x128xf32>
    %108 = arith.mulf %106, %88 : vector<8x128xf32>
    %109 = arith.mulf %105, %104 : vector<8x128xf32>
    %110 = arith.addf %108, %109 : vector<8x128xf32>
    %111 = math.tanh %110 : vector<8x128xf32>
    %112 = arith.mulf %107, %111 : vector<8x128xf32>
    %c5_i32 = arith.constant 5 : i32
    %c8_i32_21 = arith.constant 8 : i32
    %113 = arith.muli %c5_i32, %c8_i32_21 : i32
    %114 = tpu.assume_multiple %113, 8 : i32
    %115 = arith.index_cast %114 : i32 to index
    %c0_22 = arith.constant 0 : index
    %116 = vector.load %arg0[%115, %c0_22] : memref<64x512xf32, #tpu.memory_space<vmem>>, vector<8x512xf32>
    %cst_23 = arith.constant dense<0.000000e+00> : vector<8x512xf32>
    %117 = tpu.matmul %112, %0, %cst_23 {dimension_numbers = #tpu.dot_dimension_numbers<[1], [0], [0], [1], [0, 0, 1, 1], [], []>} : vector<8x128xf32>, vector<128x512xf32>, vector<8x512xf32> -> vector<8x512xf32>
    %118 = arith.addf %116, %117 : vector<8x512xf32>
    %119 = vector.extract_strided_slice %118 {offsets = [0, 0], sizes = [8, 384], strides = [1, 1]} : vector<8x512xf32> to vector<8x384xf32>
    %120 = arith.negf %119 : vector<8x384xf32>
    %121 = math.exp %120 : vector<8x384xf32>
    %cst_24 = arith.constant 1.000000e+00 : f32
    %122 = vector.broadcast %cst_24 : f32 to vector<8x384xf32>
    %123 = arith.addf %122, %121 : vector<8x384xf32>
    %124 = arith.divf %122, %123 : vector<8x384xf32>
    %125 = vector.extract_strided_slice %118 {offsets = [0, 384], sizes = [8, 128], strides = [1, 1]} : vector<8x512xf32> to vector<8x128xf32>
    %126 = math.tanh %125 : vector<8x128xf32>
    %127 = vector.extract_strided_slice %124 {offsets = [0, 0], sizes = [8, 128], strides = [1, 1]} : vector<8x384xf32> to vector<8x128xf32>
    %128 = vector.extract_strided_slice %124 {offsets = [0, 128], sizes = [8, 128], strides = [1, 1]} : vector<8x384xf32> to vector<8x128xf32>
    %129 = vector.extract_strided_slice %124 {offsets = [0, 256], sizes = [8, 128], strides = [1, 1]} : vector<8x384xf32> to vector<8x128xf32>
    %130 = arith.mulf %128, %110 : vector<8x128xf32>
    %131 = arith.mulf %127, %126 : vector<8x128xf32>
    %132 = arith.addf %130, %131 : vector<8x128xf32>
    %133 = math.tanh %132 : vector<8x128xf32>
    %134 = arith.mulf %129, %133 : vector<8x128xf32>
    %c6_i32 = arith.constant 6 : i32
    %c8_i32_25 = arith.constant 8 : i32
    %135 = arith.muli %c6_i32, %c8_i32_25 : i32
    %136 = tpu.assume_multiple %135, 8 : i32
    %137 = arith.index_cast %136 : i32 to index
    %c0_26 = arith.constant 0 : index
    %138 = vector.load %arg0[%137, %c0_26] : memref<64x512xf32, #tpu.memory_space<vmem>>, vector<8x512xf32>
    %cst_27 = arith.constant dense<0.000000e+00> : vector<8x512xf32>
    %139 = tpu.matmul %134, %0, %cst_27 {dimension_numbers = #tpu.dot_dimension_numbers<[1], [0], [0], [1], [0, 0, 1, 1], [], []>} : vector<8x128xf32>, vector<128x512xf32>, vector<8x512xf32> -> vector<8x512xf32>
    %140 = arith.addf %138, %139 : vector<8x512xf32>
    %141 = vector.extract_strided_slice %140 {offsets = [0, 0], sizes = [8, 384], strides = [1, 1]} : vector<8x512xf32> to vector<8x384xf32>
    %142 = arith.negf %141 : vector<8x384xf32>
    %143 = math.exp %142 : vector<8x384xf32>
    %cst_28 = arith.constant 1.000000e+00 : f32
    %144 = vector.broadcast %cst_28 : f32 to vector<8x384xf32>
    %145 = arith.addf %144, %143 : vector<8x384xf32>
    %146 = arith.divf %144, %145 : vector<8x384xf32>
    %147 = vector.extract_strided_slice %140 {offsets = [0, 384], sizes = [8, 128], strides = [1, 1]} : vector<8x512xf32> to vector<8x128xf32>
    %148 = math.tanh %147 : vector<8x128xf32>
    %149 = vector.extract_strided_slice %146 {offsets = [0, 0], sizes = [8, 128], strides = [1, 1]} : vector<8x384xf32> to vector<8x128xf32>
    %150 = vector.extract_strided_slice %146 {offsets = [0, 128], sizes = [8, 128], strides = [1, 1]} : vector<8x384xf32> to vector<8x128xf32>
    %151 = vector.extract_strided_slice %146 {offsets = [0, 256], sizes = [8, 128], strides = [1, 1]} : vector<8x384xf32> to vector<8x128xf32>
    %152 = arith.mulf %150, %132 : vector<8x128xf32>
    %153 = arith.mulf %149, %148 : vector<8x128xf32>
    %154 = arith.addf %152, %153 : vector<8x128xf32>
    %155 = math.tanh %154 : vector<8x128xf32>
    %156 = arith.mulf %151, %155 : vector<8x128xf32>
    %c7_i32 = arith.constant 7 : i32
    %c8_i32_29 = arith.constant 8 : i32
    %157 = arith.muli %c7_i32, %c8_i32_29 : i32
    %158 = tpu.assume_multiple %157, 8 : i32
    %159 = arith.index_cast %158 : i32 to index
    %c0_30 = arith.constant 0 : index
    %160 = vector.load %arg0[%159, %c0_30] : memref<64x512xf32, #tpu.memory_space<vmem>>, vector<8x512xf32>
    %cst_31 = arith.constant dense<0.000000e+00> : vector<8x512xf32>
    %161 = tpu.matmul %156, %0, %cst_31 {dimension_numbers = #tpu.dot_dimension_numbers<[1], [0], [0], [1], [0, 0, 1, 1], [], []>} : vector<8x128xf32>, vector<128x512xf32>, vector<8x512xf32> -> vector<8x512xf32>
    %162 = arith.addf %160, %161 : vector<8x512xf32>
    %163 = vector.extract_strided_slice %162 {offsets = [0, 0], sizes = [8, 384], strides = [1, 1]} : vector<8x512xf32> to vector<8x384xf32>
    %164 = arith.negf %163 : vector<8x384xf32>
    %165 = math.exp %164 : vector<8x384xf32>
    %cst_32 = arith.constant 1.000000e+00 : f32
    %166 = vector.broadcast %cst_32 : f32 to vector<8x384xf32>
    %167 = arith.addf %166, %165 : vector<8x384xf32>
    %168 = arith.divf %166, %167 : vector<8x384xf32>
    %169 = vector.extract_strided_slice %162 {offsets = [0, 384], sizes = [8, 128], strides = [1, 1]} : vector<8x512xf32> to vector<8x128xf32>
    %170 = math.tanh %169 : vector<8x128xf32>
    %171 = vector.extract_strided_slice %168 {offsets = [0, 0], sizes = [8, 128], strides = [1, 1]} : vector<8x384xf32> to vector<8x128xf32>
    %172 = vector.extract_strided_slice %168 {offsets = [0, 128], sizes = [8, 128], strides = [1, 1]} : vector<8x384xf32> to vector<8x128xf32>
    %173 = vector.extract_strided_slice %168 {offsets = [0, 256], sizes = [8, 128], strides = [1, 1]} : vector<8x384xf32> to vector<8x128xf32>
    %174 = arith.mulf %172, %154 : vector<8x128xf32>
    %175 = arith.mulf %171, %170 : vector<8x128xf32>
    %176 = arith.addf %174, %175 : vector<8x128xf32>
    %177 = math.tanh %176 : vector<8x128xf32>
    %178 = arith.mulf %173, %177 : vector<8x128xf32>
    %c8_i32_33 = arith.constant 8 : i32
    %179 = vector.extract_strided_slice %178 {offsets = [0, 0], sizes = [2, 128], strides = [1, 1]} : vector<8x128xf32> to vector<2x128xf32>
    %180 = vector.extract_strided_slice %178 {offsets = [2, 0], sizes = [2, 128], strides = [1, 1]} : vector<8x128xf32> to vector<2x128xf32>
    %181 = arith.mulf %179, %180 : vector<2x128xf32>
    %c0_34 = arith.constant 0 : index
    %c0_35 = arith.constant 0 : index
    %182 = vector.load %arg2[%c0_34, %c0_35] : memref<128x2xf32, #tpu.memory_space<vmem>>, vector<128x2xf32>
    %cst_36 = arith.constant dense<0.000000e+00> : vector<2x2xf32>
    %183 = tpu.matmul %181, %182, %cst_36 {dimension_numbers = #tpu.dot_dimension_numbers<[1], [0], [0], [1], [0, 0, 1, 1], [], []>} : vector<2x128xf32>, vector<128x2xf32>, vector<2x2xf32> -> vector<2x2xf32>
    %c0_37 = arith.constant 0 : index
    %c0_38 = arith.constant 0 : index
    %184 = vector.load %arg3[%c0_37, %c0_38] : memref<1x2xf32, #tpu.memory_space<vmem>>, vector<1x2xf32>
    %185 = vector.broadcast %184 : vector<1x2xf32> to vector<2x2xf32>
    %186 = arith.addf %183, %185 : vector<2x2xf32>
    %c0_39 = arith.constant 0 : index
    %c0_40 = arith.constant 0 : index
    %187 = vector.load %arg4[%c0_39, %c0_40] : memref<2x2xf32, #tpu.memory_space<vmem>>, vector<2x2xf32>
    tpu.vector_store %arg4[%c0_39, %c0_40], %186 {strides = array<i32>} : memref<2x2xf32, #tpu.memory_space<vmem>>, vector<2x2xf32>,
    return
  }
}

</mosaic_0001>

<llo_original>
// kernel: lstm_forward.1
$region0: #{lstm_forward.1}
  #allocation0 [shape = 'u32[]', space=smem, size = 0x4, offset = 0x4, fixed_abs, tag = 'smem constant byte address 0x4 - core index']
  #allocation1 [shape = 'u32[144,128]{1,0:T(1,128)}', space=vmem, size = 0x12000, scoped, tag = 'internal scratch']
  %s0 = inlined_call_operand.vmem [shape: f32[64,512], index: 0, kind: input, shape index: {}]
  %s1 = inlined_call_operand.vmem [shape: f32[128,512], index: 1, kind: input, shape index: {}]
  %s2 = inlined_call_operand.vmem [shape: f32[128,2], index: 2, kind: input, shape index: {}]
  %s3 = inlined_call_operand.vmem [shape: f32[1,2], index: 3, kind: input, shape index: {}]
  %s4 = inlined_call_operand.hbm [shape: f32[2,2], index: 4, kind: output, shape index: {}]
  %s5 = sld [smem:[#allocation0]]
  $region26: #{lstm_forward.1} parent=0
    _
  %s7 = ssub.s32 1, %s5
  %s8 = scalar_select 0, %s7, %s5
  $region1: #{lstm_forward.1} parent=0
    #allocation2 [shape = 'u8[1024]{0}', space=vmem, size = 0x400, scoped, tag = 'output window, operand 0, single buffered']
    #allocation3 [shape = 's32[1]{0}', space=sflag, size = 0x4, scoped, tag = 'scoped memory for lstm_forward.1']
    %9 = vsyncpa [#allocation3], 0
    // Predicated region
    $region2: #{lstm_forward.1} parent=1 // pred_check
      _
    $region3: #{lstm_forward.1} parent=1 // pred_check_branch
      %11 = sbr.rel (0) target = $region5
    $region4: #{lstm_forward.1} parent=1 // pred_region
      _
    $region5: #{lstm_forward.1} parent=1 // pred_fallthru
      _
    // Predicated region
    $region6: #{lstm_forward.1} parent=1 // pred_check
      _
    $region7: #{lstm_forward.1} parent=1 // pred_check_branch
      %13 = sbr.rel (0) target = $region9
    $region8: #{lstm_forward.1} parent=1 // pred_region
      _
    $region9: #{lstm_forward.1} parent=1 // pred_fallthru
      _
    // Predicated region
    $region10: #{lstm_forward.1} parent=1 // pred_check
      _
    $region11: #{lstm_forward.1} parent=1 // pred_check_branch
      %15 = sbr.rel (0) target = $region13
    $region12: #{lstm_forward.1} parent=1 // pred_region
      _
    $region13: #{lstm_forward.1} parent=1 // pred_fallthru
      _
    // Predicated region
    $region14: #{lstm_forward.1} parent=1 // pred_check
      _
    $region15: #{lstm_forward.1} parent=1 // pred_check_branch
      %17 = sbr.rel (0) target = $region17
    $region16: #{lstm_forward.1} parent=1 // pred_region
      _
    $region17: #{lstm_forward.1} parent=1 // pred_fallthru
      _
    %v18 = vld [vmem:[%s1] sm:$0xff]
    %v19 = vld [vmem:[%s1 + $0x8] sm:$0xff]
    %v20 = vld [vmem:[%s1 + $0x10] sm:$0xff]
    %v21 = vld [vmem:[%s1 + $0x18] sm:$0xff]
    %v22 = vld [vmem:[%s1 + $0x20] sm:$0xff]
    %v23 = vld [vmem:[%s1 + $0x28] sm:$0xff]
    %v24 = vld [vmem:[%s1 + $0x30] sm:$0xff]
    %v25 = vld [vmem:[%s1 + $0x38] sm:$0xff]
    %v26 = vld [vmem:[%s1 + $0x40] sm:$0xff]
    %v27 = vld [vmem:[%s1 + $0x48] sm:$0xff]
    %v28 = vld [vmem:[%s1 + $0x50] sm:$0xff]
    %v29 = vld [vmem:[%s1 + $0x58] sm:$0xff]
    %v30 = vld [vmem:[%s1 + $0x60] sm:$0xff]
    %v31 = vld [vmem:[%s1 + $0x68] sm:$0xff]
    %v32 = vld [vmem:[%s1 + $0x70] sm:$0xff]
    %v33 = vld [vmem:[%s1 + $0x78] sm:$0xff]
    %v34 = vld [vmem:[%s1 + $0x80] sm:$0xff]
    %v35 = vld [vmem:[%s1 + $0x88] sm:$0xff]
    %v36 = vld [vmem:[%s1 + $0x90] sm:$0xff]
    %v37 = vld [vmem:[%s1 + $0x98] sm:$0xff]
    %v38 = vld [vmem:[%s1 + $0xa0] sm:$0xff]
    %v39 = vld [vmem:[%s1 + $0xa8] sm:$0xff]
    %v40 = vld [vmem:[%s1 + $0xb0] sm:$0xff]
    %v41 = vld [vmem:[%s1 + $0xb8] sm:$0xff]
    %v42 = vld [vmem:[%s1 + $0xc0] sm:$0xff]
    %v43 = vld [vmem:[%s1 + $0xc8] sm:$0xff]
    %v44 = vld [vmem:[%s1 + $0xd0] sm:$0xff]
    %v45 = vld [vmem:[%s1 + $0xd8] sm:$0xff]
    %v46 = vld [vmem:[%s1 + $0xe0] sm:$0xff]
    %v47 = vld [vmem:[%s1 + $0xe8] sm:$0xff]
    %v48 = vld [vmem:[%s1 + $0xf0] sm:$0xff]
    %v49 = vld [vmem:[%s1 + $0xf8] sm:$0xff]
    %v50 = vld [vmem:[%s1 + $0x100] sm:$0xff]
    %v51 = vld [vmem:[%s1 + $0x108] sm:$0xff]
    %v52 = vld [vmem:[%s1 + $0x110] sm:$0xff]
    %v53 = vld [vmem:[%s1 + $0x118] sm:$0xff]
    %v54 = vld [vmem:[%s1 + $0x120] sm:$0xff]
    %v55 = vld [vmem:[%s1 + $0x128] sm:$0xff]
    %v56 = vld [vmem:[%s1 + $0x130] sm:$0xff]
    %v57 = vld [vmem:[%s1 + $0x138] sm:$0xff]
    %v58 = vld [vmem:[%s1 + $0x140] sm:$0xff]
    %v59 = vld [vmem:[%s1 + $0x148] sm:$0xff]
    %v60 = vld [vmem:[%s1 + $0x150] sm:$0xff]
    %v61 = vld [vmem:[%s1 + $0x158] sm:$0xff]
    %v62 = vld [vmem:[%s1 + $0x160] sm:$0xff]
    %v63 = vld [vmem:[%s1 + $0x168] sm:$0xff]
    %v64 = vld [vmem:[%s1 + $0x170] sm:$0xff]
    %v65 = vld [vmem:[%s1 + $0x178] sm:$0xff]
    %v66 = vld [vmem:[%s1 + $0x180] sm:$0xff]
    %v67 = vld [vmem:[%s1 + $0x188] sm:$0xff]
    %v68 = vld [vmem:[%s1 + $0x190] sm:$0xff]
    %v69 = vld [vmem:[%s1 + $0x198] sm:$0xff]
    %v70 = vld [vmem:[%s1 + $0x1a0] sm:$0xff]
    %v71 = vld [vmem:[%s1 + $0x1a8] sm:$0xff]
    %v72 = vld [vmem:[%s1 + $0x1b0] sm:$0xff]
    %v73 = vld [vmem:[%s1 + $0x1b8] sm:$0xff]
    %v74 = vld [vmem:[%s1 + $0x1c0] sm:$0xff]
    %v75 = vld [vmem:[%s1 + $0x1c8] sm:$0xff]
    %v76 = vld [vmem:[%s1 + $0x1d0] sm:$0xff]
    %v77 = vld [vmem:[%s1 + $0x1d8] sm:$0xff]
    %v78 = vld [vmem:[%s1 + $0x1e0] sm:$0xff]
    %v79 = vld [vmem:[%s1 + $0x1e8] sm:$0xff]
    %v80 = vld [vmem:[%s1 + $0x1f0] sm:$0xff]
    %v81 = vld [vmem:[%s1 + $0x1f8] sm:$0xff]
    %s82 = smul.u32 0, 4
    %s83 = smul.addr %s82, 8
    %s84 = scalar_lea.vmem %s0, %s83
    %v85 = vld [vmem:[%s84] sm:$0xff]
    %v86 = vld [vmem:[%s84 + $0x8] sm:$0xff]
    %v87 = vld [vmem:[%s84 + $0x10] sm:$0xff]
    %v88 = vld [vmem:[%s84 + $0x18] sm:$0xff]
    %89 = vmatprep.subr.mxu0 %v79
    %90 = vmatpush1.msra.mxu0 %v78
    %91 = vmatprep.subr.mxu0 %v75
    %92 = vmatpush1.msra.mxu0 %v74
    %93 = vmatprep.subr.mxu0 %v71
    %94 = vmatpush1.msra.mxu0 %v70
    %95 = vmatprep.subr.mxu0 %v67
    %96 = vmatpush1.msra.mxu0 %v66
    %97 = vmatprep.subr.mxu0 %v63
    %98 = vmatpush1.msra.mxu0 %v62
    %99 = vmatprep.subr.mxu0 %v59
    %100 = vmatpush1.msra.mxu0 %v58
    %101 = vmatprep.subr.mxu0 %v55
    %102 = vmatpush1.msra.mxu0 %v54
    %103 = vmatprep.subr.mxu0 %v51
    %104 = vmatpush1.msra.mxu0 %v50
    %105 = vmatprep.subr.mxu0 %v47
    %106 = vmatpush1.msra.mxu0 %v46
    %107 = vmatprep.subr.mxu0 %v43
    %108 = vmatpush1.msra.mxu0 %v42
    %109 = vmatprep.subr.mxu0 %v39
    %110 = vmatpush1.msra.mxu0 %v38
    %111 = vmatprep.subr.mxu0 %v35
    %112 = vmatpush1.msra.mxu0 %v34
    %113 = vmatprep.subr.mxu0 %v31
    %114 = vmatpush1.msra.mxu0 %v30
    %115 = vmatprep.subr.mxu0 %v27
    %116 = vmatpush1.msra.mxu0 %v26
    %117 = vmatprep.subr.mxu0 %v23
    %118 = vmatpush1.msra.mxu0 %v22
    %119 = vmatprep.subr.mxu0 %v19
    %120 = vmatpush1.msra.mxu0 %v18
    %121 = vmatprep.subr.mxu0 0.0
    %122 = vmatpush2.msra.mxu0 0.0
    %123 = vmatprep.subr.mxu0 0.0
    %124 = vmatpush2.msra.mxu0 0.0
    %125 = vmatprep.subr.mxu0 0.0
    %126 = vmatpush2.msra.mxu0 0.0
    %127 = vmatprep.subr.mxu0 0.0
    %128 = vmatpush2.msra.mxu0 0.0
    %129 = vmatprep.subr.mxu0 0.0
    %130 = vmatpush2.msra.mxu0 0.0
    %131 = vmatprep.subr.mxu0 0.0
    %132 = vmatpush2.msra.mxu0 0.0
    %133 = vmatprep.subr.mxu0 0.0
    %134 = vmatpush2.msra.mxu0 0.0
    %135 = vmatprep.subr.mxu0 0.0
    %136 = vmatpush2.msra.mxu0 0.0
    %137 = vmatprep.subr.mxu0 0.0
    %138 = vmatpush2.msra.mxu0 0.0
    %139 = vmatprep.subr.mxu0 0.0
    %140 = vmatpush2.msra.mxu0 0.0
    %141 = vmatprep.subr.mxu0 0.0
    %142 = vmatpush2.msra.mxu0 0.0
    %143 = vmatprep.subr.mxu0 0.0
    %144 = vmatpush2.msra.mxu0 0.0
    %145 = vmatprep.subr.mxu0 0.0
    %146 = vmatpush2.msra.mxu0 0.0
    %147 = vmatprep.subr.mxu0 0.0
    %148 = vmatpush2.msra.mxu0 0.0
    %149 = vmatprep.subr.mxu0 0.0
    %150 = vmatpush2.msra.mxu0 0.0
    %151 = vmatprep.subr.mxu0 0.0
    %152 = vmatpush2.msra.mxu0 0.0
    %153 = vmatprep.mubr.f32.mxu0 0.0
    %154 = vmatmul.mubr.f32.gmra.mxu0 0.0
    %v155 = vpop.f32.mrf.mxu0
    %v156 = vadd.f32 0.0, %v155
    %v157 = vpop.f32.mrf.mxu0
    %v158 = vadd.f32 0.0, %v157
    %159 = vdwg.mxu0
    %160 = vmatprep.subr.mxu0 %v81
    %161 = vmatpush1.msra.mxu0 %v80
    %162 = vmatprep.subr.mxu0 %v77
    %163 = vmatpush1.msra.mxu0 %v76
    %164 = vmatprep.subr.mxu0 %v73
    %165 = vmatpush1.msra.mxu0 %v72
    %166 = vmatprep.subr.mxu0 %v69
    %167 = vmatpush1.msra.mxu0 %v68
    %168 = vmatprep.subr.mxu0 %v65
    %169 = vmatpush1.msra.mxu0 %v64
    %170 = vmatprep.subr.mxu0 %v61
    %171 = vmatpush1.msra.mxu0 %v60
    %172 = vmatprep.subr.mxu0 %v57
    %173 = vmatpush1.msra.mxu0 %v56
    %174 = vmatprep.subr.mxu0 %v53
    %175 = vmatpush1.msra.mxu0 %v52
    %176 = vmatprep.subr.mxu0 %v49
    %177 = vmatpush1.msra.mxu0 %v48
    %178 = vmatprep.subr.mxu0 %v45
    %179 = vmatpush1.msra.mxu0 %v44
    %180 = vmatprep.subr.mxu0 %v41
    %181 = vmatpush1.msra.mxu0 %v40
    %182 = vmatprep.subr.mxu0 %v37
    %183 = vmatpush1.msra.mxu0 %v36
    %184 = vmatprep.subr.mxu0 %v33
    %185 = vmatpush1.msra.mxu0 %v32
    %186 = vmatprep.subr.mxu0 %v29
    %187 = vmatpush1.msra.mxu0 %v28
    %188 = vmatprep.subr.mxu0 %v25
    %189 = vmatpush1.msra.mxu0 %v24
    %190 = vmatprep.subr.mxu0 %v21
    %191 = vmatpush1.msra.mxu0 %v20
    %192 = vmatprep.subr.mxu0 0.0
    %193 = vmatpush2.msra.mxu0 0.0
    %194 = vmatprep.subr.mxu0 0.0
    %195 = vmatpush2.msra.mxu0 0.0
    %196 = vmatprep.subr.mxu0 0.0
    %197 = vmatpush2.msra.mxu0 0.0
    %198 = vmatprep.subr.mxu0 0.0
    %199 = vmatpush2.msra.mxu0 0.0
    %200 = vmatprep.subr.mxu0 0.0
    %201 = vmatpush2.msra.mxu0 0.0
    %202 = vmatprep.subr.mxu0 0.0
    %203 = vmatpush2.msra.mxu0 0.0
    %204 = vmatprep.subr.mxu0 0.0
    %205 = vmatpush2.msra.mxu0 0.0
    %206 = vmatprep.subr.mxu0 0.0
    %207 = vmatpush2.msra.mxu0 0.0
    %208 = vmatprep.subr.mxu0 0.0
    %209 = vmatpush2.msra.mxu0 0.0
    %210 = vmatprep.subr.mxu0 0.0
    %211 = vmatpush2.msra.mxu0 0.0
    %212 = vmatprep.subr.mxu0 0.0
    %213 = vmatpush2.msra.mxu0 0.0
    %214 = vmatprep.subr.mxu0 0.0
    %215 = vmatpush2.msra.mxu0 0.0
    %216 = vmatprep.subr.mxu0 0.0
    %217 = vmatpush2.msra.mxu0 0.0
    %218 = vmatprep.subr.mxu0 0.0
    %219 = vmatpush2.msra.mxu0 0.0
    %220 = vmatprep.subr.mxu0 0.0
    %221 = vmatpush2.msra.mxu0 0.0
    %222 = vmatprep.subr.mxu0 0.0
    %223 = vmatpush2.msra.mxu0 0.0
    %224 = vmatprep.mubr.f32.mxu0 0.0
    %225 = vmatmul.mubr.f32.gmra.mxu0 0.0
    %v226 = vpop.f32.mrf.mxu0
    %v227 = vadd.f32 0.0, %v226
    %v228 = vpop.f32.mrf.mxu0
    %v229 = vadd.f32 0.0, %v228
    %230 = vdwg.mxu0
    %v231 = vadd.f32 %v85, %v156
    %v232 = vadd.f32 %v86, %v158
    %v233 = vadd.f32 %v87, %v227
    %v234 = vadd.f32 %v88, %v229
    %v235 = vxor.u32 %v231, 2147483648
    %v236 = vxor.u32 %v232, 2147483648
    %v237 = vxor.u32 %v233, 2147483648
    %v238 = vmul.f32 %v235, 1.442695
    %v239 = vpow.pop %v238
    %v240 = vmul.f32 %v236, 1.442695
    %v241 = vpow.pop %v240
    %v242 = vmul.f32 %v237, 1.442695
    %v243 = vpow.pop %v242
    %v244 = vadd.f32 %v239, 1.0
    %v245 = vadd.f32 %v241, 1.0
    %v246 = vadd.f32 %v243, 1.0
    %v247 = vrcp.pop %v244
    %v248 = vmul.f32 1.0, %v247
    %v249 = vrcp.pop %v245
    %v250 = vmul.f32 1.0, %v249
    %v251 = vrcp.pop %v246
    %v252 = vmul.f32 1.0, %v251
    %v253 = vtanh.pop %v234
    %v254 = vmul.f32 %v250, 0.0
    %v255 = vmul.f32 %v248, %v253
    %v256 = vadd.f32 %v254, %v255
    %v257 = vtanh.pop %v256
    %v258 = vmul.f32 %v252, %v257
    %s259 = smul.u32 1, 4
    %s260 = smul.addr %s259, 8
    %s261 = scalar_lea.vmem %s0, %s260
    %v262 = vld [vmem:[%s261] sm:$0xff]
    %v263 = vld [vmem:[%s261 + $0x8] sm:$0xff]
    %v264 = vld [vmem:[%s261 + $0x10] sm:$0xff]
    %v265 = vld [vmem:[%s261 + $0x18] sm:$0xff]
    %266 = vmatprep.subr.mxu0 %v79
    %267 = vmatpush1.msra.mxu0 %v78
    %268 = vmatprep.subr.mxu0 %v75
    %269 = vmatpush1.msra.mxu0 %v74
    %270 = vmatprep.subr.mxu0 %v71
    %271 = vmatpush1.msra.mxu0 %v70
    %272 = vmatprep.subr.mxu0 %v67
    %273 = vmatpush1.msra.mxu0 %v66
    %274 = vmatprep.subr.mxu0 %v63
    %275 = vmatpush1.msra.mxu0 %v62
    %276 = vmatprep.subr.mxu0 %v59
    %277 = vmatpush1.msra.mxu0 %v58
    %278 = vmatprep.subr.mxu0 %v55
    %279 = vmatpush1.msra.mxu0 %v54
    %280 = vmatprep.subr.mxu0 %v51
    %281 = vmatpush1.msra.mxu0 %v50
    %282 = vmatprep.subr.mxu0 %v47
    %283 = vmatpush1.msra.mxu0 %v46
    %284 = vmatprep.subr.mxu0 %v43
    %285 = vmatpush1.msra.mxu0 %v42
    %286 = vmatprep.subr.mxu0 %v39
    %287 = vmatpush1.msra.mxu0 %v38
    %288 = vmatprep.subr.mxu0 %v35
    %289 = vmatpush1.msra.mxu0 %v34
    %290 = vmatprep.subr.mxu0 %v31
    %291 = vmatpush1.msra.mxu0 %v30
    %292 = vmatprep.subr.mxu0 %v27
    %293 = vmatpush1.msra.mxu0 %v26
    %294 = vmatprep.subr.mxu0 %v23
    %295 = vmatpush1.msra.mxu0 %v22
    %296 = vmatprep.subr.mxu0 %v19
    %297 = vmatpush1.msra.mxu0 %v18
    %298 = vmatprep.subr.mxu0 0.0
    %299 = vmatpush2.msra.mxu0 0.0
    %300 = vmatprep.subr.mxu0 0.0
    %301 = vmatpush2.msra.mxu0 0.0
    %302 = vmatprep.subr.mxu0 0.0
    %303 = vmatpush2.msra.mxu0 0.0
    %304 = vmatprep.subr.mxu0 0.0
    %305 = vmatpush2.msra.mxu0 0.0
    %306 = vmatprep.subr.mxu0 0.0
    %307 = vmatpush2.msra.mxu0 0.0
    %308 = vmatprep.subr.mxu0 0.0
    %309 = vmatpush2.msra.mxu0 0.0
    %310 = vmatprep.subr.mxu0 0.0
    %311 = vmatpush2.msra.mxu0 0.0
    %312 = vmatprep.subr.mxu0 0.0
    %313 = vmatpush2.msra.mxu0 0.0
    %314 = vmatprep.subr.mxu0 0.0
    %315 = vmatpush2.msra.mxu0 0.0
    %316 = vmatprep.subr.mxu0 0.0
    %317 = vmatpush2.msra.mxu0 0.0
    %318 = vmatprep.subr.mxu0 0.0
    %319 = vmatpush2.msra.mxu0 0.0
    %320 = vmatprep.subr.mxu0 0.0
    %321 = vmatpush2.msra.mxu0 0.0
    %322 = vmatprep.subr.mxu0 0.0
    %323 = vmatpush2.msra.mxu0 0.0
    %324 = vmatprep.subr.mxu0 0.0
    %325 = vmatpush2.msra.mxu0 0.0
    %326 = vmatprep.subr.mxu0 0.0
    %327 = vmatpush2.msra.mxu0 0.0
    %328 = vmatprep.subr.mxu0 0.0
    %329 = vmatpush2.msra.mxu0 0.0
    %330 = vmatprep.mubr.f32.mxu0 0.0
    %331 = vmatmul.mubr.f32.gmra.mxu0 %v258
    %v332 = vpop.f32.mrf.mxu0
    %v333 = vadd.f32 0.0, %v332
    %v334 = vpop.f32.mrf.mxu0
    %v335 = vadd.f32 0.0, %v334
    %336 = vdwg.mxu0
    %337 = vmatprep.subr.mxu0 %v81
    %338 = vmatpush1.msra.mxu0 %v80
    %339 = vmatprep.subr.mxu0 %v77
    %340 = vmatpush1.msra.mxu0 %v76
    %341 = vmatprep.subr.mxu0 %v73
    %342 = vmatpush1.msra.mxu0 %v72
    %343 = vmatprep.subr.mxu0 %v69
    %344 = vmatpush1.msra.mxu0 %v68
    %345 = vmatprep.subr.mxu0 %v65
    %346 = vmatpush1.msra.mxu0 %v64
    %347 = vmatprep.subr.mxu0 %v61
    %348 = vmatpush1.msra.mxu0 %v60
    %349 = vmatprep.subr.mxu0 %v57
    %350 = vmatpush1.msra.mxu0 %v56
    %351 = vmatprep.subr.mxu0 %v53
    %352 = vmatpush1.msra.mxu0 %v52
    %353 = vmatprep.subr.mxu0 %v49
    %354 = vmatpush1.msra.mxu0 %v48
    %355 = vmatprep.subr.mxu0 %v45
    %356 = vmatpush1.msra.mxu0 %v44
    %357 = vmatprep.subr.mxu0 %v41
    %358 = vmatpush1.msra.mxu0 %v40
    %359 = vmatprep.subr.mxu0 %v37
    %360 = vmatpush1.msra.mxu0 %v36
    %361 = vmatprep.subr.mxu0 %v33
    %362 = vmatpush1.msra.mxu0 %v32
    %363 = vmatprep.subr.mxu0 %v29
    %364 = vmatpush1.msra.mxu0 %v28
    %365 = vmatprep.subr.mxu0 %v25
    %366 = vmatpush1.msra.mxu0 %v24
    %367 = vmatprep.subr.mxu0 %v21
    %368 = vmatpush1.msra.mxu0 %v20
    %369 = vmatprep.subr.mxu0 0.0
    %370 = vmatpush2.msra.mxu0 0.0
    %371 = vmatprep.subr.mxu0 0.0
    %372 = vmatpush2.msra.mxu0 0.0
    %373 = vmatprep.subr.mxu0 0.0
    %374 = vmatpush2.msra.mxu0 0.0
    %375 = vmatprep.subr.mxu0 0.0
    %376 = vmatpush2.msra.mxu0 0.0
    %377 = vmatprep.subr.mxu0 0.0
    %378 = vmatpush2.msra.mxu0 0.0
    %379 = vmatprep.subr.mxu0 0.0
    %380 = vmatpush2.msra.mxu0 0.0
    %381 = vmatprep.subr.mxu0 0.0
    %382 = vmatpush2.msra.mxu0 0.0
    %383 = vmatprep.subr.mxu0 0.0
    %384 = vmatpush2.msra.mxu0 0.0
    %385 = vmatprep.subr.mxu0 0.0
    %386 = vmatpush2.msra.mxu0 0.0
    %387 = vmatprep.subr.mxu0 0.0
    %388 = vmatpush2.msra.mxu0 0.0
    %389 = vmatprep.subr.mxu0 0.0
    %390 = vmatpush2.msra.mxu0 0.0
    %391 = vmatprep.subr.mxu0 0.0
    %392 = vmatpush2.msra.mxu0 0.0
    %393 = vmatprep.subr.mxu0 0.0
    %394 = vmatpush2.msra.mxu0 0.0
    %395 = vmatprep.subr.mxu0 0.0
    %396 = vmatpush2.msra.mxu0 0.0
    %397 = vmatprep.subr.mxu0 0.0
    %398 = vmatpush2.msra.mxu0 0.0
    %399 = vmatprep.subr.mxu0 0.0
    %400 = vmatpush2.msra.mxu0 0.0
    %401 = vmatprep.mubr.f32.mxu0 0.0
    %402 = vmatmul.mubr.f32.gmra.mxu0 %v258
    %v403 = vpop.f32.mrf.mxu0
    %v404 = vadd.f32 0.0, %v403
    %v405 = vpop.f32.mrf.mxu0
    %v406 = vadd.f32 0.0, %v405
    %407 = vdwg.mxu0
    %v408 = vadd.f32 %v262, %v333
    %v409 = vadd.f32 %v263, %v335
    %v410 = vadd.f32 %v264, %v404
    %v411 = vadd.f32 %v265, %v406
    %v412 = vxor.u32 %v408, 2147483648
    %v413 = vxor.u32 %v409, 2147483648
    %v414 = vxor.u32 %v410, 2147483648
    %v415 = vmul.f32 %v412, 1.442695
    %v416 = vpow.pop %v415
    %v417 = vmul.f32 %v413, 1.442695
    %v418 = vpow.pop %v417
    %v419 = vmul.f32 %v414, 1.442695
    %v420 = vpow.pop %v419
    %v421 = vadd.f32 %v416, 1.0
    %v422 = vadd.f32 %v418, 1.0
    %v423 = vadd.f32 %v420, 1.0
    %v424 = vrcp.pop %v421
    %v425 = vmul.f32 1.0, %v424
    %v426 = vrcp.pop %v422
    %v427 = vmul.f32 1.0, %v426
    %v428 = vrcp.pop %v423
    %v429 = vmul.f32 1.0, %v428
    %v430 = vtanh.pop %v411
    %v431 = vmul.f32 %v427, %v256
    %v432 = vmul.f32 %v425, %v430
    %v433 = vadd.f32 %v431, %v432
    %v434 = vtanh.pop %v433
    %v435 = vmul.f32 %v429, %v434
    %s436 = smul.u32 2, 4
    %s437 = smul.addr %s436, 8
    %s438 = scalar_lea.vmem %s0, %s437
    %v439 = vld [vmem:[%s438] sm:$0xff]
    %v440 = vld [vmem:[%s438 + $0x8] sm:$0xff]
    %v441 = vld [vmem:[%s438 + $0x10] sm:$0xff]
    %v442 = vld [vmem:[%s438 + $0x18] sm:$0xff]
    %443 = vmatprep.subr.mxu0 %v79
    %444 = vmatpush1.msra.mxu0 %v78
    %445 = vmatprep.subr.mxu0 %v75
    %446 = vmatpush1.msra.mxu0 %v74
    %447 = vmatprep.subr.mxu0 %v71
    %448 = vmatpush1.msra.mxu0 %v70
    %449 = vmatprep.subr.mxu0 %v67
    %450 = vmatpush1.msra.mxu0 %v66
    %451 = vmatprep.subr.mxu0 %v63
    %452 = vmatpush1.msra.mxu0 %v62
    %453 = vmatprep.subr.mxu0 %v59
    %454 = vmatpush1.msra.mxu0 %v58
    %455 = vmatprep.subr.mxu0 %v55
    %456 = vmatpush1.msra.mxu0 %v54
    %457 = vmatprep.subr.mxu0 %v51
    %458 = vmatpush1.msra.mxu0 %v50
    %459 = vmatprep.subr.mxu0 %v47
    %460 = vmatpush1.msra.mxu0 %v46
    %461 = vmatprep.subr.mxu0 %v43
    %462 = vmatpush1.msra.mxu0 %v42
    %463 = vmatprep.subr.mxu0 %v39
    %464 = vmatpush1.msra.mxu0 %v38
    %465 = vmatprep.subr.mxu0 %v35
    %466 = vmatpush1.msra.mxu0 %v34
    %467 = vmatprep.subr.mxu0 %v31
    %468 = vmatpush1.msra.mxu0 %v30
    %469 = vmatprep.subr.mxu0 %v27
    %470 = vmatpush1.msra.mxu0 %v26
    %471 = vmatprep.subr.mxu0 %v23
    %472 = vmatpush1.msra.mxu0 %v22
    %473 = vmatprep.subr.mxu0 %v19
    %474 = vmatpush1.msra.mxu0 %v18
    %475 = vmatprep.subr.mxu0 0.0
    %476 = vmatpush2.msra.mxu0 0.0
    %477 = vmatprep.subr.mxu0 0.0
    %478 = vmatpush2.msra.mxu0 0.0
    %479 = vmatprep.subr.mxu0 0.0
    %480 = vmatpush2.msra.mxu0 0.0
    %481 = vmatprep.subr.mxu0 0.0
    %482 = vmatpush2.msra.mxu0 0.0
    %483 = vmatprep.subr.mxu0 0.0
    %484 = vmatpush2.msra.mxu0 0.0
    %485 = vmatprep.subr.mxu0 0.0
    %486 = vmatpush2.msra.mxu0 0.0
    %487 = vmatprep.subr.mxu0 0.0
    %488 = vmatpush2.msra.mxu0 0.0
    %489 = vmatprep.subr.mxu0 0.0
    %490 = vmatpush2.msra.mxu0 0.0
    %491 = vmatprep.subr.mxu0 0.0
    %492 = vmatpush2.msra.mxu0 0.0
    %493 = vmatprep.subr.mxu0 0.0
    %494 = vmatpush2.msra.mxu0 0.0
    %495 = vmatprep.subr.mxu0 0.0
    %496 = vmatpush2.msra.mxu0 0.0
    %497 = vmatprep.subr.mxu0 0.0
    %498 = vmatpush2.msra.mxu0 0.0
    %499 = vmatprep.subr.mxu0 0.0
    %500 = vmatpush2.msra.mxu0 0.0
    %501 = vmatprep.subr.mxu0 0.0
    %502 = vmatpush2.msra.mxu0 0.0
    %503 = vmatprep.subr.mxu0 0.0
    %504 = vmatpush2.msra.mxu0 0.0
    %505 = vmatprep.subr.mxu0 0.0
    %506 = vmatpush2.msra.mxu0 0.0
    %507 = vmatprep.mubr.f32.mxu0 0.0
    %508 = vmatmul.mubr.f32.gmra.mxu0 %v435
    %v509 = vpop.f32.mrf.mxu0
    %v510 = vadd.f32 0.0, %v509
    %v511 = vpop.f32.mrf.mxu0
    %v512 = vadd.f32 0.0, %v511
    %513 = vdwg.mxu0
    %514 = vmatprep.subr.mxu0 %v81
    %515 = vmatpush1.msra.mxu0 %v80
    %516 = vmatprep.subr.mxu0 %v77
    %517 = vmatpush1.msra.mxu0 %v76
    %518 = vmatprep.subr.mxu0 %v73
    %519 = vmatpush1.msra.mxu0 %v72
    %520 = vmatprep.subr.mxu0 %v69
    %521 = vmatpush1.msra.mxu0 %v68
    %522 = vmatprep.subr.mxu0 %v65
    %523 = vmatpush1.msra.mxu0 %v64
    %524 = vmatprep.subr.mxu0 %v61
    %525 = vmatpush1.msra.mxu0 %v60
    %526 = vmatprep.subr.mxu0 %v57
    %527 = vmatpush1.msra.mxu0 %v56
    %528 = vmatprep.subr.mxu0 %v53
    %529 = vmatpush1.msra.mxu0 %v52
    %530 = vmatprep.subr.mxu0 %v49
    %531 = vmatpush1.msra.mxu0 %v48
    %532 = vmatprep.subr.mxu0 %v45
    %533 = vmatpush1.msra.mxu0 %v44
    %534 = vmatprep.subr.mxu0 %v41
    %535 = vmatpush1.msra.mxu0 %v40
    %536 = vmatprep.subr.mxu0 %v37
    %537 = vmatpush1.msra.mxu0 %v36
    %538 = vmatprep.subr.mxu0 %v33
    %539 = vmatpush1.msra.mxu0 %v32
    %540 = vmatprep.subr.mxu0 %v29
    %541 = vmatpush1.msra.mxu0 %v28
    %542 = vmatprep.subr.mxu0 %v25
    %543 = vmatpush1.msra.mxu0 %v24
    %544 = vmatprep.subr.mxu0 %v21
    %545 = vmatpush1.msra.mxu0 %v20
    %546 = vmatprep.subr.mxu0 0.0
    %547 = vmatpush2.msra.mxu0 0.0
    %548 = vmatprep.subr.mxu0 0.0
    %549 = vmatpush2.msra.mxu0 0.0
    %550 = vmatprep.subr.mxu0 0.0
    %551 = vmatpush2.msra.mxu0 0.0
    %552 = vmatprep.subr.mxu0 0.0
    %553 = vmatpush2.msra.mxu0 0.0
    %554 = vmatprep.subr.mxu0 0.0
    %555 = vmatpush2.msra.mxu0 0.0
    %556 = vmatprep.subr.mxu0 0.0
    %557 = vmatpush2.msra.mxu0 0.0
    %558 = vmatprep.subr.mxu0 0.0
    %559 = vmatpush2.msra.mxu0 0.0
    %560 = vmatprep.subr.mxu0 0.0
    %561 = vmatpush2.msra.mxu0 0.0
    %562 = vmatprep.subr.mxu0 0.0
    %563 = vmatpush2.msra.mxu0 0.0
    %564 = vmatprep.subr.mxu0 0.0
    %565 = vmatpush2.msra.mxu0 0.0
    %566 = vmatprep.subr.mxu0 0.0
    %567 = vmatpush2.msra.mxu0 0.0
    %568 = vmatprep.subr.mxu0 0.0
    %569 = vmatpush2.msra.mxu0 0.0
    %570 = vmatprep.subr.mxu0 0.0
    %571 = vmatpush2.msra.mxu0 0.0
    %572 = vmatprep.subr.mxu0 0.0
    %573 = vmatpush2.msra.mxu0 0.0
    %574 = vmatprep.subr.mxu0 0.0
    %575 = vmatpush2.msra.mxu0 0.0
    %576 = vmatprep.subr.mxu0 0.0
    %577 = vmatpush2.msra.mxu0 0.0
    %578 = vmatprep.mubr.f32.mxu0 0.0
    %579 = vmatmul.mubr.f32.gmra.mxu0 %v435
    %v580 = vpop.f32.mrf.mxu0
    %v581 = vadd.f32 0.0, %v580
    %v582 = vpop.f32.mrf.mxu0
    %v583 = vadd.f32 0.0, %v582
    %584 = vdwg.mxu0
    %v585 = vadd.f32 %v439, %v510
    %v586 = vadd.f32 %v440, %v512
    %v587 = vadd.f32 %v441, %v581
    %v588 = vadd.f32 %v442, %v583
    %v589 = vxor.u32 %v585, 2147483648
    %v590 = vxor.u32 %v586, 2147483648
    %v591 = vxor.u32 %v587, 2147483648
    %v592 = vmul.f32 %v589, 1.442695
    %v593 = vpow.pop %v592
    %v594 = vmul.f32 %v590, 1.442695
    %v595 = vpow.pop %v594
    %v596 = vmul.f32 %v591, 1.442695
    %v597 = vpow.pop %v596
    %v598 = vadd.f32 %v593, 1.0
    %v599 = vadd.f32 %v595, 1.0
    %v600 = vadd.f32 %v597, 1.0
    %v601 = vrcp.pop %v598
    %v602 = vmul.f32 1.0, %v601
    %v603 = vrcp.pop %v599
    %v604 = vmul.f32 1.0, %v603
    %v605 = vrcp.pop %v600
    %v606 = vmul.f32 1.0, %v605
    %v607 = vtanh.pop %v588
    %v608 = vmul.f32 %v604, %v433
    %v609 = vmul.f32 %v602, %v607
    %v610 = vadd.f32 %v608, %v609
    %v611 = vtanh.pop %v610
    %v612 = vmul.f32 %v606, %v611
    %s613 = smul.u32 3, 4
    %s614 = smul.addr %s613, 8
    %s615 = scalar_lea.vmem %s0, %s614
    %v616 = vld [vmem:[%s615] sm:$0xff]
    %v617 = vld [vmem:[%s615 + $0x8] sm:$0xff]
    %v618 = vld [vmem:[%s615 + $0x10] sm:$0xff]
    %v619 = vld [vmem:[%s615 + $0x18] sm:$0xff]
    %620 = vmatprep.subr.mxu0 %v79
    %621 = vmatpush1.msra.mxu0 %v78
    %622 = vmatprep.subr.mxu0 %v75
    %623 = vmatpush1.msra.mxu0 %v74
    %624 = vmatprep.subr.mxu0 %v71
    %625 = vmatpush1.msra.mxu0 %v70
    %626 = vmatprep.subr.mxu0 %v67
    %627 = vmatpush1.msra.mxu0 %v66
    %628 = vmatprep.subr.mxu0 %v63
    %629 = vmatpush1.msra.mxu0 %v62
    %630 = vmatprep.subr.mxu0 %v59
    %631 = vmatpush1.msra.mxu0 %v58
    %632 = vmatprep.subr.mxu0 %v55
    %633 = vmatpush1.msra.mxu0 %v54
    %634 = vmatprep.subr.mxu0 %v51
    %635 = vmatpush1.msra.mxu0 %v50
    %636 = vmatprep.subr.mxu0 %v47
    %637 = vmatpush1.msra.mxu0 %v46
    %638 = vmatprep.subr.mxu0 %v43
    %639 = vmatpush1.msra.mxu0 %v42
    %640 = vmatprep.subr.mxu0 %v39
    %641 = vmatpush1.msra.mxu0 %v38
    %642 = vmatprep.subr.mxu0 %v35
    %643 = vmatpush1.msra.mxu0 %v34
    %644 = vmatprep.subr.mxu0 %v31
    %645 = vmatpush1.msra.mxu0 %v30
    %646 = vmatprep.subr.mxu0 %v27
    %647 = vmatpush1.msra.mxu0 %v26
    %648 = vmatprep.subr.mxu0 %v23
    %649 = vmatpush1.msra.mxu0 %v22
    %650 = vmatprep.subr.mxu0 %v19
    %651 = vmatpush1.msra.mxu0 %v18
    %652 = vmatprep.subr.mxu0 0.0
    %653 = vmatpush2.msra.mxu0 0.0
    %654 = vmatprep.subr.mxu0 0.0
    %655 = vmatpush2.msra.mxu0 0.0
    %656 = vmatprep.subr.mxu0 0.0
    %657 = vmatpush2.msra.mxu0 0.0
    %658 = vmatprep.subr.mxu0 0.0
    %659 = vmatpush2.msra.mxu0 0.0
    %660 = vmatprep.subr.mxu0 0.0
    %661 = vmatpush2.msra.mxu0 0.0
    %662 = vmatprep.subr.mxu0 0.0
    %663 = vmatpush2.msra.mxu0 0.0
    %664 = vmatprep.subr.mxu0 0.0
    %665 = vmatpush2.msra.mxu0 0.0
    %666 = vmatprep.subr.mxu0 0.0
    %667 = vmatpush2.msra.mxu0 0.0
    %668 = vmatprep.subr.mxu0 0.0
    %669 = vmatpush2.msra.mxu0 0.0
    %670 = vmatprep.subr.mxu0 0.0
    %671 = vmatpush2.msra.mxu0 0.0
    %672 = vmatprep.subr.mxu0 0.0
    %673 = vmatpush2.msra.mxu0 0.0
    %674 = vmatprep.subr.mxu0 0.0
    %675 = vmatpush2.msra.mxu0 0.0
    %676 = vmatprep.subr.mxu0 0.0
    %677 = vmatpush2.msra.mxu0 0.0
    %678 = vmatprep.subr.mxu0 0.0
    %679 = vmatpush2.msra.mxu0 0.0
    %680 = vmatprep.subr.mxu0 0.0
    %681 = vmatpush2.msra.mxu0 0.0
    %682 = vmatprep.subr.mxu0 0.0
    %683 = vmatpush2.msra.mxu0 0.0
    %684 = vmatprep.mubr.f32.mxu0 0.0
    %685 = vmatmul.mubr.f32.gmra.mxu0 %v612
    %v686 = vpop.f32.mrf.mxu0
    %v687 = vadd.f32 0.0, %v686
    %v688 = vpop.f32.mrf.mxu0
    %v689 = vadd.f32 0.0, %v688
    %690 = vdwg.mxu0
    %691 = vmatprep.subr.mxu0 %v81
    %692 = vmatpush1.msra.mxu0 %v80
    %693 = vmatprep.subr.mxu0 %v77
    %694 = vmatpush1.msra.mxu0 %v76
    %695 = vmatprep.subr.mxu0 %v73
    %696 = vmatpush1.msra.mxu0 %v72
    %697 = vmatprep.subr.mxu0 %v69
    %698 = vmatpush1.msra.mxu0 %v68
    %699 = vmatprep.subr.mxu0 %v65
    %700 = vmatpush1.msra.mxu0 %v64
    %701 = vmatprep.subr.mxu0 %v61
    %702 = vmatpush1.msra.mxu0 %v60
    %703 = vmatprep.subr.mxu0 %v57
    %704 = vmatpush1.msra.mxu0 %v56
    %705 = vmatprep.subr.mxu0 %v53
    %706 = vmatpush1.msra.mxu0 %v52
    %707 = vmatprep.subr.mxu0 %v49
    %708 = vmatpush1.msra.mxu0 %v48
    %709 = vmatprep.subr.mxu0 %v45
    %710 = vmatpush1.msra.mxu0 %v44
    %711 = vmatprep.subr.mxu0 %v41
    %712 = vmatpush1.msra.mxu0 %v40
    %713 = vmatprep.subr.mxu0 %v37
    %714 = vmatpush1.msra.mxu0 %v36
    %715 = vmatprep.subr.mxu0 %v33
    %716 = vmatpush1.msra.mxu0 %v32
    %717 = vmatprep.subr.mxu0 %v29
    %718 = vmatpush1.msra.mxu0 %v28
    %719 = vmatprep.subr.mxu0 %v25
    %720 = vmatpush1.msra.mxu0 %v24
    %721 = vmatprep.subr.mxu0 %v21
    %722 = vmatpush1.msra.mxu0 %v20
    %723 = vmatprep.subr.mxu0 0.0
    %724 = vmatpush2.msra.mxu0 0.0
    %725 = vmatprep.subr.mxu0 0.0
    %726 = vmatpush2.msra.mxu0 0.0
    %727 = vmatprep.subr.mxu0 0.0
    %728 = vmatpush2.msra.mxu0 0.0
    %729 = vmatprep.subr.mxu0 0.0
    %730 = vmatpush2.msra.mxu0 0.0
    %731 = vmatprep.subr.mxu0 0.0
    %732 = vmatpush2.msra.mxu0 0.0
    %733 = vmatprep.subr.mxu0 0.0
    %734 = vmatpush2.msra.mxu0 0.0
    %735 = vmatprep.subr.mxu0 0.0
    %736 = vmatpush2.msra.mxu0 0.0
    %737 = vmatprep.subr.mxu0 0.0
    %738 = vmatpush2.msra.mxu0 0.0
    %739 = vmatprep.subr.mxu0 0.0
    %740 = vmatpush2.msra.mxu0 0.0
    %741 = vmatprep.subr.mxu0 0.0
    %742 = vmatpush2.msra.mxu0 0.0
    %743 = vmatprep.subr.mxu0 0.0
    %744 = vmatpush2.msra.mxu0 0.0
    %745 = vmatprep.subr.mxu0 0.0
    %746 = vmatpush2.msra.mxu0 0.0
    %747 = vmatprep.subr.mxu0 0.0
    %748 = vmatpush2.msra.mxu0 0.0
    %749 = vmatprep.subr.mxu0 0.0
    %750 = vmatpush2.msra.mxu0 0.0
    %751 = vmatprep.subr.mxu0 0.0
    %752 = vmatpush2.msra.mxu0 0.0
    %753 = vmatprep.subr.mxu0 0.0
    %754 = vmatpush2.msra.mxu0 0.0
    %755 = vmatprep.mubr.f32.mxu0 0.0
    %756 = vmatmul.mubr.f32.gmra.mxu0 %v612
    %v757 = vpop.f32.mrf.mxu0
    %v758 = vadd.f32 0.0, %v757
    %v759 = vpop.f32.mrf.mxu0
    %v760 = vadd.f32 0.0, %v759
    %761 = vdwg.mxu0
    %v762 = vadd.f32 %v616, %v687
    %v763 = vadd.f32 %v617, %v689
    %v764 = vadd.f32 %v618, %v758
    %v765 = vadd.f32 %v619, %v760
    %v766 = vxor.u32 %v762, 2147483648
    %v767 = vxor.u32 %v763, 2147483648
    %v768 = vxor.u32 %v764, 2147483648
    %v769 = vmul.f32 %v766, 1.442695
    %v770 = vpow.pop %v769
    %v771 = vmul.f32 %v767, 1.442695
    %v772 = vpow.pop %v771
    %v773 = vmul.f32 %v768, 1.442695
    %v774 = vpow.pop %v773
    %v775 = vadd.f32 %v770, 1.0
    %v776 = vadd.f32 %v772, 1.0
    %v777 = vadd.f32 %v774, 1.0
    %v778 = vrcp.pop %v775
    %v779 = vmul.f32 1.0, %v778
    %v780 = vrcp.pop %v776
    %v781 = vmul.f32 1.0, %v780
    %v782 = vrcp.pop %v777
    %v783 = vmul.f32 1.0, %v782
    %v784 = vtanh.pop %v765
    %v785 = vmul.f32 %v781, %v610
    %v786 = vmul.f32 %v779, %v784
    %v787 = vadd.f32 %v785, %v786
    %v788 = vtanh.pop %v787
    %v789 = vmul.f32 %v783, %v788
    %s790 = smul.u32 4, 4
    %s791 = smul.addr %s790, 8
    %s792 = scalar_lea.vmem %s0, %s791
    %v793 = vld [vmem:[%s792] sm:$0xff]
    %v794 = vld [vmem:[%s792 + $0x8] sm:$0xff]
    %v795 = vld [vmem:[%s792 + $0x10] sm:$0xff]
    %v796 = vld [vmem:[%s792 + $0x18] sm:$0xff]
    %797 = vmatprep.subr.mxu0 %v79
    %798 = vmatpush1.msra.mxu0 %v78
    %799 = vmatprep.subr.mxu0 %v75
    %800 = vmatpush1.msra.mxu0 %v74
    %801 = vmatprep.subr.mxu0 %v71
    %802 = vmatpush1.msra.mxu0 %v70
    %803 = vmatprep.subr.mxu0 %v67
    %804 = vmatpush1.msra.mxu0 %v66
    %805 = vmatprep.subr.mxu0 %v63
    %806 = vmatpush1.msra.mxu0 %v62
    %807 = vmatprep.subr.mxu0 %v59
    %808 = vmatpush1.msra.mxu0 %v58
    %809 = vmatprep.subr.mxu0 %v55
    %810 = vmatpush1.msra.mxu0 %v54
    %811 = vmatprep.subr.mxu0 %v51
    %812 = vmatpush1.msra.mxu0 %v50
    %813 = vmatprep.subr.mxu0 %v47
    %814 = vmatpush1.msra.mxu0 %v46
    %815 = vmatprep.subr.mxu0 %v43
    %816 = vmatpush1.msra.mxu0 %v42
    %817 = vmatprep.subr.mxu0 %v39
    %818 = vmatpush1.msra.mxu0 %v38
    %819 = vmatprep.subr.mxu0 %v35
    %820 = vmatpush1.msra.mxu0 %v34
    %821 = vmatprep.subr.mxu0 %v31
    %822 = vmatpush1.msra.mxu0 %v30
    %823 = vmatprep.subr.mxu0 %v27
    %824 = vmatpush1.msra.mxu0 %v26
    %825 = vmatprep.subr.mxu0 %v23
    %826 = vmatpush1.msra.mxu0 %v22
    %827 = vmatprep.subr.mxu0 %v19
    %828 = vmatpush1.msra.mxu0 %v18
    %829 = vmatprep.subr.mxu0 0.0
    %830 = vmatpush2.msra.mxu0 0.0
    %831 = vmatprep.subr.mxu0 0.0
    %832 = vmatpush2.msra.mxu0 0.0
    %833 = vmatprep.subr.mxu0 0.0
    %834 = vmatpush2.msra.mxu0 0.0
    %835 = vmatprep.subr.mxu0 0.0
    %836 = vmatpush2.msra.mxu0 0.0
    %837 = vmatprep.subr.mxu0 0.0
    %838 = vmatpush2.msra.mxu0 0.0
    %839 = vmatprep.subr.mxu0 0.0
    %840 = vmatpush2.msra.mxu0 0.0
    %841 = vmatprep.subr.mxu0 0.0
    %842 = vmatpush2.msra.mxu0 0.0
    %843 = vmatprep.subr.mxu0 0.0
    %844 = vmatpush2.msra.mxu0 0.0
    %845 = vmatprep.subr.mxu0 0.0
    %846 = vmatpush2.msra.mxu0 0.0
    %847 = vmatprep.subr.mxu0 0.0
    %848 = vmatpush2.msra.mxu0 0.0
    %849 = vmatprep.subr.mxu0 0.0
    %850 = vmatpush2.msra.mxu0 0.0
    %851 = vmatprep.subr.mxu0 0.0
    %852 = vmatpush2.msra.mxu0 0.0
    %853 = vmatprep.subr.mxu0 0.0
    %854 = vmatpush2.msra.mxu0 0.0
    %855 = vmatprep.subr.mxu0 0.0
    %856 = vmatpush2.msra.mxu0 0.0
    %857 = vmatprep.subr.mxu0 0.0
    %858 = vmatpush2.msra.mxu0 0.0
    %859 = vmatprep.subr.mxu0 0.0
    %860 = vmatpush2.msra.mxu0 0.0
    %861 = vmatprep.mubr.f32.mxu0 0.0
    %862 = vmatmul.mubr.f32.gmra.mxu0 %v789
    %v863 = vpop.f32.mrf.mxu0
    %v864 = vadd.f32 0.0, %v863
    %v865 = vpop.f32.mrf.mxu0
    %v866 = vadd.f32 0.0, %v865
    %867 = vdwg.mxu0
    %868 = vmatprep.subr.mxu0 %v81
    %869 = vmatpush1.msra.mxu0 %v80
    %870 = vmatprep.subr.mxu0 %v77
    %871 = vmatpush1.msra.mxu0 %v76
    %872 = vmatprep.subr.mxu0 %v73
    %873 = vmatpush1.msra.mxu0 %v72
    %874 = vmatprep.subr.mxu0 %v69
    %875 = vmatpush1.msra.mxu0 %v68
    %876 = vmatprep.subr.mxu0 %v65
    %877 = vmatpush1.msra.mxu0 %v64
    %878 = vmatprep.subr.mxu0 %v61
    %879 = vmatpush1.msra.mxu0 %v60
    %880 = vmatprep.subr.mxu0 %v57
    %881 = vmatpush1.msra.mxu0 %v56
    %882 = vmatprep.subr.mxu0 %v53
    %883 = vmatpush1.msra.mxu0 %v52
    %884 = vmatprep.subr.mxu0 %v49
    %885 = vmatpush1.msra.mxu0 %v48
    %886 = vmatprep.subr.mxu0 %v45
    %887 = vmatpush1.msra.mxu0 %v44
    %888 = vmatprep.subr.mxu0 %v41
    %889 = vmatpush1.msra.mxu0 %v40
    %890 = vmatprep.subr.mxu0 %v37
    %891 = vmatpush1.msra.mxu0 %v36
    %892 = vmatprep.subr.mxu0 %v33
    %893 = vmatpush1.msra.mxu0 %v32
    %894 = vmatprep.subr.mxu0 %v29
    %895 = vmatpush1.msra.mxu0 %v28
    %896 = vmatprep.subr.mxu0 %v25
    %897 = vmatpush1.msra.mxu0 %v24
    %898 = vmatprep.subr.mxu0 %v21
    %899 = vmatpush1.msra.mxu0 %v20
    %900 = vmatprep.subr.mxu0 0.0
    %901 = vmatpush2.msra.mxu0 0.0
    %902 = vmatprep.subr.mxu0 0.0
    %903 = vmatpush2.msra.mxu0 0.0
    %904 = vmatprep.subr.mxu0 0.0
    %905 = vmatpush2.msra.mxu0 0.0
    %906 = vmatprep.subr.mxu0 0.0
    %907 = vmatpush2.msra.mxu0 0.0
    %908 = vmatprep.subr.mxu0 0.0
    %909 = vmatpush2.msra.mxu0 0.0
    %910 = vmatprep.subr.mxu0 0.0
    %911 = vmatpush2.msra.mxu0 0.0
    %912 = vmatprep.subr.mxu0 0.0
    %913 = vmatpush2.msra.mxu0 0.0
    %914 = vmatprep.subr.mxu0 0.0
    %915 = vmatpush2.msra.mxu0 0.0
    %916 = vmatprep.subr.mxu0 0.0
    %917 = vmatpush2.msra.mxu0 0.0
    %918 = vmatprep.subr.mxu0 0.0
    %919 = vmatpush2.msra.mxu0 0.0
    %920 = vmatprep.subr.mxu0 0.0
    %921 = vmatpush2.msra.mxu0 0.0
    %922 = vmatprep.subr.mxu0 0.0
    %923 = vmatpush2.msra.mxu0 0.0
    %924 = vmatprep.subr.mxu0 0.0
    %925 = vmatpush2.msra.mxu0 0.0
    %926 = vmatprep.subr.mxu0 0.0
    %927 = vmatpush2.msra.mxu0 0.0
    %928 = vmatprep.subr.mxu0 0.0
    %929 = vmatpush2.msra.mxu0 0.0
    %930 = vmatprep.subr.mxu0 0.0
    %931 = vmatpush2.msra.mxu0 0.0
    %932 = vmatprep.mubr.f32.mxu0 0.0
    %933 = vmatmul.mubr.f32.gmra.mxu0 %v789
    %v934 = vpop.f32.mrf.mxu0
    %v935 = vadd.f32 0.0, %v934
    %v936 = vpop.f32.mrf.mxu0
    %v937 = vadd.f32 0.0, %v936
    %938 = vdwg.mxu0
    %v939 = vadd.f32 %v793, %v864
    %v940 = vadd.f32 %v794, %v866
    %v941 = vadd.f32 %v795, %v935
    %v942 = vadd.f32 %v796, %v937
    %v943 = vxor.u32 %v939, 2147483648
    %v944 = vxor.u32 %v940, 2147483648
    %v945 = vxor.u32 %v941, 2147483648
    %v946 = vmul.f32 %v943, 1.442695
    %v947 = vpow.pop %v946
    %v948 = vmul.f32 %v944, 1.442695
    %v949 = vpow.pop %v948
    %v950 = vmul.f32 %v945, 1.442695
    %v951 = vpow.pop %v950
    %v952 = vadd.f32 %v947, 1.0
    %v953 = vadd.f32 %v949, 1.0
    %v954 = vadd.f32 %v951, 1.0
    %v955 = vrcp.pop %v952
    %v956 = vmul.f32 1.0, %v955
    %v957 = vrcp.pop %v953
    %v958 = vmul.f32 1.0, %v957
    %v959 = vrcp.pop %v954
    %v960 = vmul.f32 1.0, %v959
    %v961 = vtanh.pop %v942
    %v962 = vmul.f32 %v958, %v787
    %v963 = vmul.f32 %v956, %v961
    %v964 = vadd.f32 %v962, %v963
    %v965 = vtanh.pop %v964
    %v966 = vmul.f32 %v960, %v965
    %s967 = smul.u32 5, 4
    %s968 = smul.addr %s967, 8
    %s969 = scalar_lea.vmem %s0, %s968
    %v970 = vld [vmem:[%s969] sm:$0xff]
    %v971 = vld [vmem:[%s969 + $0x8] sm:$0xff]
    %v972 = vld [vmem:[%s969 + $0x10] sm:$0xff]
    %v973 = vld [vmem:[%s969 + $0x18] sm:$0xff]
    %974 = vmatprep.subr.mxu0 %v79
    %975 = vmatpush1.msra.mxu0 %v78
    %976 = vmatprep.subr.mxu0 %v75
    %977 = vmatpush1.msra.mxu0 %v74
    %978 = vmatprep.subr.mxu0 %v71
    %979 = vmatpush1.msra.mxu0 %v70
    %980 = vmatprep.subr.mxu0 %v67
    %981 = vmatpush1.msra.mxu0 %v66
    %982 = vmatprep.subr.mxu0 %v63
    %983 = vmatpush1.msra.mxu0 %v62
    %984 = vmatprep.subr.mxu0 %v59
    %985 = vmatpush1.msra.mxu0 %v58
    %986 = vmatprep.subr.mxu0 %v55
    %987 = vmatpush1.msra.mxu0 %v54
    %988 = vmatprep.subr.mxu0 %v51
    %989 = vmatpush1.msra.mxu0 %v50
    %990 = vmatprep.subr.mxu0 %v47
    %991 = vmatpush1.msra.mxu0 %v46
    %992 = vmatprep.subr.mxu0 %v43
    %993 = vmatpush1.msra.mxu0 %v42
    %994 = vmatprep.subr.mxu0 %v39
    %995 = vmatpush1.msra.mxu0 %v38
    %996 = vmatprep.subr.mxu0 %v35
    %997 = vmatpush1.msra.mxu0 %v34
    %998 = vmatprep.subr.mxu0 %v31
    %999 = vmatpush1.msra.mxu0 %v30
    %1000 = vmatprep.subr.mxu0 %v27
    %1001 = vmatpush1.msra.mxu0 %v26
    %1002 = vmatprep.subr.mxu0 %v23
    %1003 = vmatpush1.msra.mxu0 %v22
    %1004 = vmatprep.subr.mxu0 %v19
    %1005 = vmatpush1.msra.mxu0 %v18
    %1006 = vmatprep.subr.mxu0 0.0
    %1007 = vmatpush2.msra.mxu0 0.0
    %1008 = vmatprep.subr.mxu0 0.0
    %1009 = vmatpush2.msra.mxu0 0.0
    %1010 = vmatprep.subr.mxu0 0.0
    %1011 = vmatpush2.msra.mxu0 0.0
    %1012 = vmatprep.subr.mxu0 0.0
    %1013 = vmatpush2.msra.mxu0 0.0
    %1014 = vmatprep.subr.mxu0 0.0
    %1015 = vmatpush2.msra.mxu0 0.0
    %1016 = vmatprep.subr.mxu0 0.0
    %1017 = vmatpush2.msra.mxu0 0.0
    %1018 = vmatprep.subr.mxu0 0.0
    %1019 = vmatpush2.msra.mxu0 0.0
    %1020 = vmatprep.subr.mxu0 0.0
    %1021 = vmatpush2.msra.mxu0 0.0
    %1022 = vmatprep.subr.mxu0 0.0
    %1023 = vmatpush2.msra.mxu0 0.0
    %1024 = vmatprep.subr.mxu0 0.0
    %1025 = vmatpush2.msra.mxu0 0.0
    %1026 = vmatprep.subr.mxu0 0.0
    %1027 = vmatpush2.msra.mxu0 0.0
    %1028 = vmatprep.subr.mxu0 0.0
    %1029 = vmatpush2.msra.mxu0 0.0
    %1030 = vmatprep.subr.mxu0 0.0
    %1031 = vmatpush2.msra.mxu0 0.0
    %1032 = vmatprep.subr.mxu0 0.0
    %1033 = vmatpush2.msra.mxu0 0.0
    %1034 = vmatprep.subr.mxu0 0.0
    %1035 = vmatpush2.msra.mxu0 0.0
    %1036 = vmatprep.subr.mxu0 0.0
    %1037 = vmatpush2.msra.mxu0 0.0
    %1038 = vmatprep.mubr.f32.mxu0 0.0
    %1039 = vmatmul.mubr.f32.gmra.mxu0 %v966
    %v1040 = vpop.f32.mrf.mxu0
    %v1041 = vadd.f32 0.0, %v1040
    %v1042 = vpop.f32.mrf.mxu0
    %v1043 = vadd.f32 0.0, %v1042
    %1044 = vdwg.mxu0
    %1045 = vmatprep.subr.mxu0 %v81
    %1046 = vmatpush1.msra.mxu0 %v80
    %1047 = vmatprep.subr.mxu0 %v77
    %1048 = vmatpush1.msra.mxu0 %v76
    %1049 = vmatprep.subr.mxu0 %v73
    %1050 = vmatpush1.msra.mxu0 %v72
    %1051 = vmatprep.subr.mxu0 %v69
    %1052 = vmatpush1.msra.mxu0 %v68
    %1053 = vmatprep.subr.mxu0 %v65
    %1054 = vmatpush1.msra.mxu0 %v64
    %1055 = vmatprep.subr.mxu0 %v61
    %1056 = vmatpush1.msra.mxu0 %v60
    %1057 = vmatprep.subr.mxu0 %v57
    %1058 = vmatpush1.msra.mxu0 %v56
    %1059 = vmatprep.subr.mxu0 %v53
    %1060 = vmatpush1.msra.mxu0 %v52
    %1061 = vmatprep.subr.mxu0 %v49
    %1062 = vmatpush1.msra.mxu0 %v48
    %1063 = vmatprep.subr.mxu0 %v45
    %1064 = vmatpush1.msra.mxu0 %v44
    %1065 = vmatprep.subr.mxu0 %v41
    %1066 = vmatpush1.msra.mxu0 %v40
    %1067 = vmatprep.subr.mxu0 %v37
    %1068 = vmatpush1.msra.mxu0 %v36
    %1069 = vmatprep.subr.mxu0 %v33
    %1070 = vmatpush1.msra.mxu0 %v32
    %1071 = vmatprep.subr.mxu0 %v29
    %1072 = vmatpush1.msra.mxu0 %v28
    %1073 = vmatprep.subr.mxu0 %v25
    %1074 = vmatpush1.msra.mxu0 %v24
    %1075 = vmatprep.subr.mxu0 %v21
    %1076 = vmatpush1.msra.mxu0 %v20
    %1077 = vmatprep.subr.mxu0 0.0
    %1078 = vmatpush2.msra.mxu0 0.0
    %1079 = vmatprep.subr.mxu0 0.0
    %1080 = vmatpush2.msra.mxu0 0.0
    %1081 = vmatprep.subr.mxu0 0.0
    %1082 = vmatpush2.msra.mxu0 0.0
    %1083 = vmatprep.subr.mxu0 0.0
    %1084 = vmatpush2.msra.mxu0 0.0
    %1085 = vmatprep.subr.mxu0 0.0
    %1086 = vmatpush2.msra.mxu0 0.0
    %1087 = vmatprep.subr.mxu0 0.0
    %1088 = vmatpush2.msra.mxu0 0.0
    %1089 = vmatprep.subr.mxu0 0.0
    %1090 = vmatpush2.msra.mxu0 0.0
    %1091 = vmatprep.subr.mxu0 0.0
    %1092 = vmatpush2.msra.mxu0 0.0
    %1093 = vmatprep.subr.mxu0 0.0
    %1094 = vmatpush2.msra.mxu0 0.0
    %1095 = vmatprep.subr.mxu0 0.0
    %1096 = vmatpush2.msra.mxu0 0.0
    %1097 = vmatprep.subr.mxu0 0.0
    %1098 = vmatpush2.msra.mxu0 0.0
    %1099 = vmatprep.subr.mxu0 0.0
    %1100 = vmatpush2.msra.mxu0 0.0
    %1101 = vmatprep.subr.mxu0 0.0
    %1102 = vmatpush2.msra.mxu0 0.0
    %1103 = vmatprep.subr.mxu0 0.0
    %1104 = vmatpush2.msra.mxu0 0.0
    %1105 = vmatprep.subr.mxu0 0.0
    %1106 = vmatpush2.msra.mxu0 0.0
    %1107 = vmatprep.subr.mxu0 0.0
    %1108 = vmatpush2.msra.mxu0 0.0
    %1109 = vmatprep.mubr.f32.mxu0 0.0
    %1110 = vmatmul.mubr.f32.gmra.mxu0 %v966
    %v1111 = vpop.f32.mrf.mxu0
    %v1112 = vadd.f32 0.0, %v1111
    %v1113 = vpop.f32.mrf.mxu0
    %v1114 = vadd.f32 0.0, %v1113
    %1115 = vdwg.mxu0
    %v1116 = vadd.f32 %v970, %v1041
    %v1117 = vadd.f32 %v971, %v1043
    %v1118 = vadd.f32 %v972, %v1112
    %v1119 = vadd.f32 %v973, %v1114
    %v1120 = vxor.u32 %v1116, 2147483648
    %v1121 = vxor.u32 %v1117, 2147483648
    %v1122 = vxor.u32 %v1118, 2147483648
    %v1123 = vmul.f32 %v1120, 1.442695
    %v1124 = vpow.pop %v1123
    %v1125 = vmul.f32 %v1121, 1.442695
    %v1126 = vpow.pop %v1125
    %v1127 = vmul.f32 %v1122, 1.442695
    %v1128 = vpow.pop %v1127
    %v1129 = vadd.f32 %v1124, 1.0
    %v1130 = vadd.f32 %v1126, 1.0
    %v1131 = vadd.f32 %v1128, 1.0
    %v1132 = vrcp.pop %v1129
    %v1133 = vmul.f32 1.0, %v1132
    %v1134 = vrcp.pop %v1130
    %v1135 = vmul.f32 1.0, %v1134
    %v1136 = vrcp.pop %v1131
    %v1137 = vmul.f32 1.0, %v1136
    %v1138 = vtanh.pop %v1119
    %v1139 = vmul.f32 %v1135, %v964
    %v1140 = vmul.f32 %v1133, %v1138
    %v1141 = vadd.f32 %v1139, %v1140
    %v1142 = vtanh.pop %v1141
    %v1143 = vmul.f32 %v1137, %v1142
    %s1144 = smul.u32 6, 4
    %s1145 = smul.addr %s1144, 8
    %s1146 = scalar_lea.vmem %s0, %s1145
    %v1147 = vld [vmem:[%s1146] sm:$0xff]
    %v1148 = vld [vmem:[%s1146 + $0x8] sm:$0xff]
    %v1149 = vld [vmem:[%s1146 + $0x10] sm:$0xff]
    %v1150 = vld [vmem:[%s1146 + $0x18] sm:$0xff]
    %1151 = vmatprep.subr.mxu0 %v79
    %1152 = vmatpush1.msra.mxu0 %v78
    %1153 = vmatprep.subr.mxu0 %v75
    %1154 = vmatpush1.msra.mxu0 %v74
    %1155 = vmatprep.subr.mxu0 %v71
    %1156 = vmatpush1.msra.mxu0 %v70
    %1157 = vmatprep.subr.mxu0 %v67
    %1158 = vmatpush1.msra.mxu0 %v66
    %1159 = vmatprep.subr.mxu0 %v63
    %1160 = vmatpush1.msra.mxu0 %v62
    %1161 = vmatprep.subr.mxu0 %v59
    %1162 = vmatpush1.msra.mxu0 %v58
    %1163 = vmatprep.subr.mxu0 %v55
    %1164 = vmatpush1.msra.mxu0 %v54
    %1165 = vmatprep.subr.mxu0 %v51
    %1166 = vmatpush1.msra.mxu0 %v50
    %1167 = vmatprep.subr.mxu0 %v47
    %1168 = vmatpush1.msra.mxu0 %v46
    %1169 = vmatprep.subr.mxu0 %v43
    %1170 = vmatpush1.msra.mxu0 %v42
    %1171 = vmatprep.subr.mxu0 %v39
    %1172 = vmatpush1.msra.mxu0 %v38
    %1173 = vmatprep.subr.mxu0 %v35
    %1174 = vmatpush1.msra.mxu0 %v34
    %1175 = vmatprep.subr.mxu0 %v31
    %1176 = vmatpush1.msra.mxu0 %v30
    %1177 = vmatprep.subr.mxu0 %v27
    %1178 = vmatpush1.msra.mxu0 %v26
    %1179 = vmatprep.subr.mxu0 %v23
    %1180 = vmatpush1.msra.mxu0 %v22
    %1181 = vmatprep.subr.mxu0 %v19
    %1182 = vmatpush1.msra.mxu0 %v18
    %1183 = vmatprep.subr.mxu0 0.0
    %1184 = vmatpush2.msra.mxu0 0.0
    %1185 = vmatprep.subr.mxu0 0.0
    %1186 = vmatpush2.msra.mxu0 0.0
    %1187 = vmatprep.subr.mxu0 0.0
    %1188 = vmatpush2.msra.mxu0 0.0
    %1189 = vmatprep.subr.mxu0 0.0
    %1190 = vmatpush2.msra.mxu0 0.0
    %1191 = vmatprep.subr.mxu0 0.0
    %1192 = vmatpush2.msra.mxu0 0.0
    %1193 = vmatprep.subr.mxu0 0.0
    %1194 = vmatpush2.msra.mxu0 0.0
    %1195 = vmatprep.subr.mxu0 0.0
    %1196 = vmatpush2.msra.mxu0 0.0
    %1197 = vmatprep.subr.mxu0 0.0
    %1198 = vmatpush2.msra.mxu0 0.0
    %1199 = vmatprep.subr.mxu0 0.0
    %1200 = vmatpush2.msra.mxu0 0.0
    %1201 = vmatprep.subr.mxu0 0.0
    %1202 = vmatpush2.msra.mxu0 0.0
    %1203 = vmatprep.subr.mxu0 0.0
    %1204 = vmatpush2.msra.mxu0 0.0
    %1205 = vmatprep.subr.mxu0 0.0
    %1206 = vmatpush2.msra.mxu0 0.0
    %1207 = vmatprep.subr.mxu0 0.0
    %1208 = vmatpush2.msra.mxu0 0.0
    %1209 = vmatprep.subr.mxu0 0.0
    %1210 = vmatpush2.msra.mxu0 0.0
    %1211 = vmatprep.subr.mxu0 0.0
    %1212 = vmatpush2.msra.mxu0 0.0
    %1213 = vmatprep.subr.mxu0 0.0
    %1214 = vmatpush2.msra.mxu0 0.0
    %1215 = vmatprep.mubr.f32.mxu0 0.0
    %1216 = vmatmul.mubr.f32.gmra.mxu0 %v1143
    %v1217 = vpop.f32.mrf.mxu0
    %v1218 = vadd.f32 0.0, %v1217
    %v1219 = vpop.f32.mrf.mxu0
    %v1220 = vadd.f32 0.0, %v1219
    %1221 = vdwg.mxu0
    %1222 = vmatprep.subr.mxu0 %v81
    %1223 = vmatpush1.msra.mxu0 %v80
    %1224 = vmatprep.subr.mxu0 %v77
    %1225 = vmatpush1.msra.mxu0 %v76
    %1226 = vmatprep.subr.mxu0 %v73
    %1227 = vmatpush1.msra.mxu0 %v72
    %1228 = vmatprep.subr.mxu0 %v69
    %1229 = vmatpush1.msra.mxu0 %v68
    %1230 = vmatprep.subr.mxu0 %v65
    %1231 = vmatpush1.msra.mxu0 %v64
    %1232 = vmatprep.subr.mxu0 %v61
    %1233 = vmatpush1.msra.mxu0 %v60
    %1234 = vmatprep.subr.mxu0 %v57
    %1235 = vmatpush1.msra.mxu0 %v56
    %1236 = vmatprep.subr.mxu0 %v53
    %1237 = vmatpush1.msra.mxu0 %v52
    %1238 = vmatprep.subr.mxu0 %v49
    %1239 = vmatpush1.msra.mxu0 %v48
    %1240 = vmatprep.subr.mxu0 %v45
    %1241 = vmatpush1.msra.mxu0 %v44
    %1242 = vmatprep.subr.mxu0 %v41
    %1243 = vmatpush1.msra.mxu0 %v40
    %1244 = vmatprep.subr.mxu0 %v37
    %1245 = vmatpush1.msra.mxu0 %v36
    %1246 = vmatprep.subr.mxu0 %v33
    %1247 = vmatpush1.msra.mxu0 %v32
    %1248 = vmatprep.subr.mxu0 %v29
    %1249 = vmatpush1.msra.mxu0 %v28
    %1250 = vmatprep.subr.mxu0 %v25
    %1251 = vmatpush1.msra.mxu0 %v24
    %1252 = vmatprep.subr.mxu0 %v21
    %1253 = vmatpush1.msra.mxu0 %v20
    %1254 = vmatprep.subr.mxu0 0.0
    %1255 = vmatpush2.msra.mxu0 0.0
    %1256 = vmatprep.subr.mxu0 0.0
    %1257 = vmatpush2.msra.mxu0 0.0
    %1258 = vmatprep.subr.mxu0 0.0
    %1259 = vmatpush2.msra.mxu0 0.0
    %1260 = vmatprep.subr.mxu0 0.0
    %1261 = vmatpush2.msra.mxu0 0.0
    %1262 = vmatprep.subr.mxu0 0.0
    %1263 = vmatpush2.msra.mxu0 0.0
    %1264 = vmatprep.subr.mxu0 0.0
    %1265 = vmatpush2.msra.mxu0 0.0
    %1266 = vmatprep.subr.mxu0 0.0
    %1267 = vmatpush2.msra.mxu0 0.0
    %1268 = vmatprep.subr.mxu0 0.0
    %1269 = vmatpush2.msra.mxu0 0.0
    %1270 = vmatprep.subr.mxu0 0.0
    %1271 = vmatpush2.msra.mxu0 0.0
    %1272 = vmatprep.subr.mxu0 0.0
    %1273 = vmatpush2.msra.mxu0 0.0
    %1274 = vmatprep.subr.mxu0 0.0
    %1275 = vmatpush2.msra.mxu0 0.0
    %1276 = vmatprep.subr.mxu0 0.0
    %1277 = vmatpush2.msra.mxu0 0.0
    %1278 = vmatprep.subr.mxu0 0.0
    %1279 = vmatpush2.msra.mxu0 0.0
    %1280 = vmatprep.subr.mxu0 0.0
    %1281 = vmatpush2.msra.mxu0 0.0
    %1282 = vmatprep.subr.mxu0 0.0
    %1283 = vmatpush2.msra.mxu0 0.0
    %1284 = vmatprep.subr.mxu0 0.0
    %1285 = vmatpush2.msra.mxu0 0.0
    %1286 = vmatprep.mubr.f32.mxu0 0.0
    %1287 = vmatmul.mubr.f32.gmra.mxu0 %v1143
    %v1288 = vpop.f32.mrf.mxu0
    %v1289 = vadd.f32 0.0, %v1288
    %v1290 = vpop.f32.mrf.mxu0
    %v1291 = vadd.f32 0.0, %v1290
    %1292 = vdwg.mxu0
    %v1293 = vadd.f32 %v1147, %v1218
    %v1294 = vadd.f32 %v1148, %v1220
    %v1295 = vadd.f32 %v1149, %v1289
    %v1296 = vadd.f32 %v1150, %v1291
    %v1297 = vxor.u32 %v1293, 2147483648
    %v1298 = vxor.u32 %v1294, 2147483648
    %v1299 = vxor.u32 %v1295, 2147483648
    %v1300 = vmul.f32 %v1297, 1.442695
    %v1301 = vpow.pop %v1300
    %v1302 = vmul.f32 %v1298, 1.442695
    %v1303 = vpow.pop %v1302
    %v1304 = vmul.f32 %v1299, 1.442695
    %v1305 = vpow.pop %v1304
    %v1306 = vadd.f32 %v1301, 1.0
    %v1307 = vadd.f32 %v1303, 1.0
    %v1308 = vadd.f32 %v1305, 1.0
    %v1309 = vrcp.pop %v1306
    %v1310 = vmul.f32 1.0, %v1309
    %v1311 = vrcp.pop %v1307
    %v1312 = vmul.f32 1.0, %v1311
    %v1313 = vrcp.pop %v1308
    %v1314 = vmul.f32 1.0, %v1313
    %v1315 = vtanh.pop %v1296
    %v1316 = vmul.f32 %v1312, %v1141
    %v1317 = vmul.f32 %v1310, %v1315
    %v1318 = vadd.f32 %v1316, %v1317
    %v1319 = vtanh.pop %v1318
    %v1320 = vmul.f32 %v1314, %v1319
    %s1321 = smul.u32 7, 4
    %s1322 = smul.addr %s1321, 8
    %s1323 = scalar_lea.vmem %s0, %s1322
    %v1324 = vld [vmem:[%s1323] sm:$0xff]
    %v1325 = vld [vmem:[%s1323 + $0x8] sm:$0xff]
    %v1326 = vld [vmem:[%s1323 + $0x10] sm:$0xff]
    %v1327 = vld [vmem:[%s1323 + $0x18] sm:$0xff]
    %1328 = vmatprep.subr.mxu0 %v79
    %1329 = vmatpush1.msra.mxu0 %v78
    %1330 = vmatprep.subr.mxu0 %v75
    %1331 = vmatpush1.msra.mxu0 %v74
    %1332 = vmatprep.subr.mxu0 %v71
    %1333 = vmatpush1.msra.mxu0 %v70
    %1334 = vmatprep.subr.mxu0 %v67
    %1335 = vmatpush1.msra.mxu0 %v66
    %1336 = vmatprep.subr.mxu0 %v63
    %1337 = vmatpush1.msra.mxu0 %v62
    %1338 = vmatprep.subr.mxu0 %v59
    %1339 = vmatpush1.msra.mxu0 %v58
    %1340 = vmatprep.subr.mxu0 %v55
    %1341 = vmatpush1.msra.mxu0 %v54
    %1342 = vmatprep.subr.mxu0 %v51
    %1343 = vmatpush1.msra.mxu0 %v50
    %1344 = vmatprep.subr.mxu0 %v47
    %1345 = vmatpush1.msra.mxu0 %v46
    %1346 = vmatprep.subr.mxu0 %v43
    %1347 = vmatpush1.msra.mxu0 %v42
    %1348 = vmatprep.subr.mxu0 %v39
    %1349 = vmatpush1.msra.mxu0 %v38
    %1350 = vmatprep.subr.mxu0 %v35
    %1351 = vmatpush1.msra.mxu0 %v34
    %1352 = vmatprep.subr.mxu0 %v31
    %1353 = vmatpush1.msra.mxu0 %v30
    %1354 = vmatprep.subr.mxu0 %v27
    %1355 = vmatpush1.msra.mxu0 %v26
    %1356 = vmatprep.subr.mxu0 %v23
    %1357 = vmatpush1.msra.mxu0 %v22
    %1358 = vmatprep.subr.mxu0 %v19
    %1359 = vmatpush1.msra.mxu0 %v18
    %1360 = vmatprep.subr.mxu0 0.0
    %1361 = vmatpush2.msra.mxu0 0.0
    %1362 = vmatprep.subr.mxu0 0.0
    %1363 = vmatpush2.msra.mxu0 0.0
    %1364 = vmatprep.subr.mxu0 0.0
    %1365 = vmatpush2.msra.mxu0 0.0
    %1366 = vmatprep.subr.mxu0 0.0
    %1367 = vmatpush2.msra.mxu0 0.0
    %1368 = vmatprep.subr.mxu0 0.0
    %1369 = vmatpush2.msra.mxu0 0.0
    %1370 = vmatprep.subr.mxu0 0.0
    %1371 = vmatpush2.msra.mxu0 0.0
    %1372 = vmatprep.subr.mxu0 0.0
    %1373 = vmatpush2.msra.mxu0 0.0
    %1374 = vmatprep.subr.mxu0 0.0
    %1375 = vmatpush2.msra.mxu0 0.0
    %1376 = vmatprep.subr.mxu0 0.0
    %1377 = vmatpush2.msra.mxu0 0.0
    %1378 = vmatprep.subr.mxu0 0.0
    %1379 = vmatpush2.msra.mxu0 0.0
    %1380 = vmatprep.subr.mxu0 0.0
    %1381 = vmatpush2.msra.mxu0 0.0
    %1382 = vmatprep.subr.mxu0 0.0
    %1383 = vmatpush2.msra.mxu0 0.0
    %1384 = vmatprep.subr.mxu0 0.0
    %1385 = vmatpush2.msra.mxu0 0.0
    %1386 = vmatprep.subr.mxu0 0.0
    %1387 = vmatpush2.msra.mxu0 0.0
    %1388 = vmatprep.subr.mxu0 0.0
    %1389 = vmatpush2.msra.mxu0 0.0
    %1390 = vmatprep.subr.mxu0 0.0
    %1391 = vmatpush2.msra.mxu0 0.0
    %1392 = vmatprep.mubr.f32.mxu0 0.0
    %1393 = vmatmul.mubr.f32.gmra.mxu0 %v1320
    %v1394 = vpop.f32.mrf.mxu0
    %v1395 = vadd.f32 0.0, %v1394
    %v1396 = vpop.f32.mrf.mxu0
    %v1397 = vadd.f32 0.0, %v1396
    %1398 = vdwg.mxu0
    %1399 = vmatprep.subr.mxu0 %v81
    %1400 = vmatpush1.msra.mxu0 %v80
    %1401 = vmatprep.subr.mxu0 %v77
    %1402 = vmatpush1.msra.mxu0 %v76
    %1403 = vmatprep.subr.mxu0 %v73
    %1404 = vmatpush1.msra.mxu0 %v72
    %1405 = vmatprep.subr.mxu0 %v69
    %1406 = vmatpush1.msra.mxu0 %v68
    %1407 = vmatprep.subr.mxu0 %v65
    %1408 = vmatpush1.msra.mxu0 %v64
    %1409 = vmatprep.subr.mxu0 %v61
    %1410 = vmatpush1.msra.mxu0 %v60
    %1411 = vmatprep.subr.mxu0 %v57
    %1412 = vmatpush1.msra.mxu0 %v56
    %1413 = vmatprep.subr.mxu0 %v53
    %1414 = vmatpush1.msra.mxu0 %v52
    %1415 = vmatprep.subr.mxu0 %v49
    %1416 = vmatpush1.msra.mxu0 %v48
    %1417 = vmatprep.subr.mxu0 %v45
    %1418 = vmatpush1.msra.mxu0 %v44
    %1419 = vmatprep.subr.mxu0 %v41
    %1420 = vmatpush1.msra.mxu0 %v40
    %1421 = vmatprep.subr.mxu0 %v37
    %1422 = vmatpush1.msra.mxu0 %v36
    %1423 = vmatprep.subr.mxu0 %v33
    %1424 = vmatpush1.msra.mxu0 %v32
    %1425 = vmatprep.subr.mxu0 %v29
    %1426 = vmatpush1.msra.mxu0 %v28
    %1427 = vmatprep.subr.mxu0 %v25
    %1428 = vmatpush1.msra.mxu0 %v24
    %1429 = vmatprep.subr.mxu0 %v21
    %1430 = vmatpush1.msra.mxu0 %v20
    %1431 = vmatprep.subr.mxu0 0.0
    %1432 = vmatpush2.msra.mxu0 0.0
    %1433 = vmatprep.subr.mxu0 0.0
    %1434 = vmatpush2.msra.mxu0 0.0
    %1435 = vmatprep.subr.mxu0 0.0
    %1436 = vmatpush2.msra.mxu0 0.0
    %1437 = vmatprep.subr.mxu0 0.0
    %1438 = vmatpush2.msra.mxu0 0.0
    %1439 = vmatprep.subr.mxu0 0.0
    %1440 = vmatpush2.msra.mxu0 0.0
    %1441 = vmatprep.subr.mxu0 0.0
    %1442 = vmatpush2.msra.mxu0 0.0
    %1443 = vmatprep.subr.mxu0 0.0
    %1444 = vmatpush2.msra.mxu0 0.0
    %1445 = vmatprep.subr.mxu0 0.0
    %1446 = vmatpush2.msra.mxu0 0.0
    %1447 = vmatprep.subr.mxu0 0.0
    %1448 = vmatpush2.msra.mxu0 0.0
    %1449 = vmatprep.subr.mxu0 0.0
    %1450 = vmatpush2.msra.mxu0 0.0
    %1451 = vmatprep.subr.mxu0 0.0
    %1452 = vmatpush2.msra.mxu0 0.0
    %1453 = vmatprep.subr.mxu0 0.0
    %1454 = vmatpush2.msra.mxu0 0.0
    %1455 = vmatprep.subr.mxu0 0.0
    %1456 = vmatpush2.msra.mxu0 0.0
    %1457 = vmatprep.subr.mxu0 0.0
    %1458 = vmatpush2.msra.mxu0 0.0
    %1459 = vmatprep.subr.mxu0 0.0
    %1460 = vmatpush2.msra.mxu0 0.0
    %1461 = vmatprep.subr.mxu0 0.0
    %1462 = vmatpush2.msra.mxu0 0.0
    %1463 = vmatprep.mubr.f32.mxu0 0.0
    %1464 = vmatmul.mubr.f32.gmra.mxu0 %v1320
    %v1465 = vpop.f32.mrf.mxu0
    %v1466 = vadd.f32 0.0, %v1465
    %v1467 = vpop.f32.mrf.mxu0
    %v1468 = vadd.f32 0.0, %v1467
    %1469 = vdwg.mxu0
    %v1470 = vadd.f32 %v1324, %v1395
    %v1471 = vadd.f32 %v1325, %v1397
    %v1472 = vadd.f32 %v1326, %v1466
    %v1473 = vadd.f32 %v1327, %v1468
    %v1474 = vxor.u32 %v1470, 2147483648
    %v1475 = vxor.u32 %v1471, 2147483648
    %v1476 = vxor.u32 %v1472, 2147483648
    %v1477 = vmul.f32 %v1474, 1.442695
    %v1478 = vpow.pop %v1477
    %v1479 = vmul.f32 %v1475, 1.442695
    %v1480 = vpow.pop %v1479
    %v1481 = vmul.f32 %v1476, 1.442695
    %v1482 = vpow.pop %v1481
    %v1483 = vadd.f32 %v1478, 1.0
    %v1484 = vadd.f32 %v1480, 1.0
    %v1485 = vadd.f32 %v1482, 1.0
    %v1486 = vrcp.pop %v1483
    %v1487 = vmul.f32 1.0, %v1486
    %v1488 = vrcp.pop %v1484
    %v1489 = vmul.f32 1.0, %v1488
    %v1490 = vrcp.pop %v1485
    %v1491 = vmul.f32 1.0, %v1490
    %v1492 = vtanh.pop %v1473
    %v1493 = vmul.f32 %v1489, %v1318
    %v1494 = vmul.f32 %v1487, %v1492
    %v1495 = vadd.f32 %v1493, %v1494
    %v1496 = vtanh.pop %v1495
    %v1497 = vmul.f32 %v1491, %v1496
    %v1499 = vrot.slane %v1497, 2
    %v1501 = vmul.f32 %v1497, %v1499
    %v1502 = vld [vmem:[%s2] sm:$0xff]
    %v1503 = vld [vmem:[%s2 + $0x8] sm:$0xff]
    %v1504 = vld [vmem:[%s2 + $0x10] sm:$0xff]
    %v1505 = vld [vmem:[%s2 + $0x18] sm:$0xff]
    %v1506 = vld [vmem:[%s2 + $0x20] sm:$0xff]
    %v1507 = vld [vmem:[%s2 + $0x28] sm:$0xff]
    %v1508 = vld [vmem:[%s2 + $0x30] sm:$0xff]
    %v1509 = vld [vmem:[%s2 + $0x38] sm:$0xff]
    %v1510 = vld [vmem:[%s2 + $0x40] sm:$0xff]
    %v1511 = vld [vmem:[%s2 + $0x48] sm:$0xff]
    %v1512 = vld [vmem:[%s2 + $0x50] sm:$0xff]
    %v1513 = vld [vmem:[%s2 + $0x58] sm:$0xff]
    %v1514 = vld [vmem:[%s2 + $0x60] sm:$0xff]
    %v1515 = vld [vmem:[%s2 + $0x68] sm:$0xff]
    %v1516 = vld [vmem:[%s2 + $0x70] sm:$0xff]
    %v1517 = vld [vmem:[%s2 + $0x78] sm:$0xff]
    %v1518 = vld [vmem:[%s3] sm:$0x1]
    %v1520 = vlaneseq
    %v1521 = vshrl.u32 %v1520, 7
    %v1522 = vsub.s32 0, %v1521
    %v1523 = vrot.slane %v1518, %v1522
    %1525 = vmatprep.subr.mxu0 0.0
    %1526 = vmatpush1.msra.mxu0 %v1517
    %1527 = vmatprep.subr.mxu0 0.0
    %1528 = vmatpush1.msra.mxu0 %v1516
    %1529 = vmatprep.subr.mxu0 0.0
    %1530 = vmatpush1.msra.mxu0 %v1515
    %1531 = vmatprep.subr.mxu0 0.0
    %1532 = vmatpush1.msra.mxu0 %v1514
    %1533 = vmatprep.subr.mxu0 0.0
    %1534 = vmatpush1.msra.mxu0 %v1513
    %1535 = vmatprep.subr.mxu0 0.0
    %1536 = vmatpush1.msra.mxu0 %v1512
    %1537 = vmatprep.subr.mxu0 0.0
    %1538 = vmatpush1.msra.mxu0 %v1511
    %1539 = vmatprep.subr.mxu0 0.0
    %1540 = vmatpush1.msra.mxu0 %v1510
    %1541 = vmatprep.subr.mxu0 0.0
    %1542 = vmatpush1.msra.mxu0 %v1509
    %1543 = vmatprep.subr.mxu0 0.0
    %1544 = vmatpush1.msra.mxu0 %v1508
    %1545 = vmatprep.subr.mxu0 0.0
    %1546 = vmatpush1.msra.mxu0 %v1507
    %1547 = vmatprep.subr.mxu0 0.0
    %1548 = vmatpush1.msra.mxu0 %v1506
    %1549 = vmatprep.subr.mxu0 0.0
    %1550 = vmatpush1.msra.mxu0 %v1505
    %1551 = vmatprep.subr.mxu0 0.0
    %1552 = vmatpush1.msra.mxu0 %v1504
    %1553 = vmatprep.subr.mxu0 0.0
    %1554 = vmatpush1.msra.mxu0 %v1503
    %1555 = vmatprep.subr.mxu0 0.0
    %1556 = vmatpush1.msra.mxu0 %v1502
    %1557 = vmatprep.subr.mxu0 0.0
    %1558 = vmatpush2.msra.mxu0 0.0
    %1559 = vmatprep.subr.mxu0 0.0
    %1560 = vmatpush2.msra.mxu0 0.0
    %1561 = vmatprep.subr.mxu0 0.0
    %1562 = vmatpush2.msra.mxu0 0.0
    %1563 = vmatprep.subr.mxu0 0.0
    %1564 = vmatpush2.msra.mxu0 0.0
    %1565 = vmatprep.subr.mxu0 0.0
    %1566 = vmatpush2.msra.mxu0 0.0
    %1567 = vmatprep.subr.mxu0 0.0
    %1568 = vmatpush2.msra.mxu0 0.0
    %1569 = vmatprep.subr.mxu0 0.0
    %1570 = vmatpush2.msra.mxu0 0.0
    %1571 = vmatprep.subr.mxu0 0.0
    %1572 = vmatpush2.msra.mxu0 0.0
    %1573 = vmatprep.subr.mxu0 0.0
    %1574 = vmatpush2.msra.mxu0 0.0
    %1575 = vmatprep.subr.mxu0 0.0
    %1576 = vmatpush2.msra.mxu0 0.0
    %1577 = vmatprep.subr.mxu0 0.0
    %1578 = vmatpush2.msra.mxu0 0.0
    %1579 = vmatprep.subr.mxu0 0.0
    %1580 = vmatpush2.msra.mxu0 0.0
    %1581 = vmatprep.subr.mxu0 0.0
    %1582 = vmatpush2.msra.mxu0 0.0
    %1583 = vmatprep.subr.mxu0 0.0
    %1584 = vmatpush2.msra.mxu0 0.0
    %1585 = vmatprep.subr.mxu0 0.0
    %1586 = vmatpush2.msra.mxu0 0.0
    %1587 = vmatprep.subr.mxu0 0.0
    %1588 = vmatpush2.msra.mxu0 0.0
    %1589 = vmatprep.mubr.f32.mxu0 0.0
    %1590 = vmatmul.mubr.f32.gmra.mxu0 %v1501
    %v1591 = vpop.f32.mrf.mxu0
    %v1592 = vadd.f32 %v1523, %v1591
    %v1593 = vpop.f32.mrf.mxu0
    %1594 = vdwg.mxu0
    %vm1595 = vcmask 9216
    %1596 = vst.msk [vmem:[#allocation2] sm:$0x3] %vm1595, %v1592
    // Predicated region
    $region18: #{lstm_forward.1} parent=1 // pred_check
      _
    $region19: #{lstm_forward.1} parent=1 // pred_check_branch
      %1598 = sbr.rel (0) target = $region21
    $region20: #{lstm_forward.1} parent=1 // pred_region
      %s1600 = ssub.s32 32, 32
      %1601 = vsyncadd [#allocation3], %s1600
      %s1603 = sshll.u32 [#allocation2], 4
      %s1604 = int_to_ptr.vmem [resolvable:$true] %s1603
      %1606 = dma.vmem_to_hbm [thread:$0]  %s1604, 32, %s4, [#allocation3]
    $region21: #{lstm_forward.1} parent=1 // pred_fallthru
      _
    // Predicated region
    $region22: #{lstm_forward.1} parent=1 // pred_check
      _
    $region23: #{lstm_forward.1} parent=1 // pred_check_branch
      %1608 = sbr.rel (0) target = $region25
    $region24: #{lstm_forward.1} parent=1 // pred_region
      %1609 = dma.done [#allocation3], 32
    $region25: #{lstm_forward.1} parent=1 // pred_fallthru
      _
    %1610 = vsyncpa [#allocation3], 1

</llo_original>
